<compile_context>
chip_gen: v6e
topology: v6e:2x2x1
jax: 0.10.0
libtpu: 0.0.40
codegen_flags: <defaults>
</compile_context>

<pallas_src>
import numpy as np
import jax
import jax.numpy as jnp
from jax.experimental import pallas as pl
from jax.experimental.pallas import tpu as pltpu


# ----------------------------------------------------------------------------
# Fused LeNet-5 kernel (one batch tile per grid step)
# ----------------------------------------------------------------------------
def _lenet_kernel(x_ref, w1_ref, b1_ref, w2_ref, b2_ref, pw2_ref,
                  fw1_ref, fb1_ref, fw2_ref, fb2_ref, fw3_ref, fb3_ref, o_ref):
    x = x_ref[...]                                    # (24, TB, 140) f32 im2row
    TB = x.shape[1]

    # ---- C1: ONE fused matmul over all 5 kernel rows (K = 5*28 = 140) ----
    # result lanes: co*24 + ow   (co = output channel, ow = output column)
    xs = x.reshape(24 * TB, 140).astype(jnp.bfloat16)
    h1 = jnp.dot(xs, w1_ref[...], preferred_element_type=jnp.float32)
    h1 = h1 + b1_ref[...]                             # (24*TB, 144)

    # ---- tanh, then pool1 HEIGHT pair-average only (the width half of the
    #      2x2 avg-pool is pre-folded into the conv2 weights) ----
    t1 = jnp.tanh(h1).reshape(12, 2, TB, 144)
    p1 = 0.5 * (t1[:, 0] + t1[:, 1])                  # (12, TB, 144) f32

    # ---- C2 (pool1-width folded in): 5 row-tap matmuls, K = 144 ----
    # result lanes: co*8 + ow
    h2 = None
    for di in range(5):
        xs2 = p1[di:di + 8].reshape(8 * TB, 144).astype(jnp.bfloat16)
        t = jnp.dot(xs2, w2_ref[di], preferred_element_type=jnp.float32)
        h2 = t if h2 is None else h2 + t
    h2 = h2 + b2_ref[...]                             # (8*TB, 128)

    # ---- tanh, pool2 height average, then per-pooled-row width-pool matmuls
    #      that place each pooled value directly at its flattened lane
    #      (ph*64 + co*4 + pw)  -> flatten comes out for free ----
    t2 = jnp.tanh(h2).reshape(4, 2, TB, 128)
    flat = None
    for ph in range(4):
        hp = (0.5 * (t2[ph, 0] + t2[ph, 1])).astype(jnp.bfloat16)   # (TB, 128)
        q = jnp.dot(hp, pw2_ref[ph], preferred_element_type=jnp.float32)
        flat = q if flat is None else flat + q        # (TB, 256) f32

    # ---- FC head (all lane-padded to 128; torch applies tanh before each FC) ----
    h = jnp.dot(jnp.tanh(flat).astype(jnp.bfloat16), fw1_ref[...],
                preferred_element_type=jnp.float32) + fb1_ref[...]   # (TB,128)
    h = jnp.dot(jnp.tanh(h).astype(jnp.bfloat16), fw2_ref[...],
                preferred_element_type=jnp.float32) + fb2_ref[...]
    logits = jnp.dot(jnp.tanh(h).astype(jnp.bfloat16), fw3_ref[...],
                     preferred_element_type=jnp.float32) + fb3_ref[...]
    # padded logit lanes carry bias -1e30 -> exp underflows to exactly 0.

    # ---- softmax over the last dim ----
    m = jnp.max(logits, axis=-1, keepdims=True)
    e = jnp.exp(logits - m)
    denom = jnp.sum(e, axis=-1, keepdims=True)
    r = pl.reciprocal(denom, approx=True)
    r = r * (2.0 - denom * r)                         # one Newton step -> ~exact
    o_ref[...] = e * r                                # (TB, 128) lane-dense store


# ----------------------------------------------------------------------------
# Parameter setup (torch-layout params) and one-time weight re-layout
# ----------------------------------------------------------------------------
def init_params(key):
    ks = jax.random.split(key, 10)

    def rnd(k, shape, fan_in):
        return (jax.random.normal(k, shape, jnp.float32) / np.sqrt(fan_in)).astype(jnp.float32)

    return {
        "c1_w": rnd(ks[0], (6, 1, 5, 5), 25),
        "c1_b": rnd(ks[1], (6,), 25),
        "c2_w": rnd(ks[2], (16, 6, 5, 5), 150),
        "c2_b": rnd(ks[3], (16,), 150),
        "fc1_w": rnd(ks[4], (120, 256), 256),   # torch Linear: (out, in)
        "fc1_b": rnd(ks[5], (120,), 256),
        "fc2_w": rnd(ks[6], (84, 120), 120),
        "fc2_b": rnd(ks[7], (84,), 120),
        "fc3_w": rnd(ks[8], (10, 84), 84),
        "fc3_b": rnd(ks[9], (10,), 84),
    }


def prepare_params(params):
    """Build all kernel-side weight matrices once (hoisted out of the hot path)."""
    c1w = np.asarray(params["c1_w"], np.float32)
    c1b = np.asarray(params["c1_b"], np.float32)
    c2w = np.asarray(params["c2_w"], np.float32)
    c2b = np.asarray(params["c2_b"], np.float32)
    f1w = np.asarray(params["fc1_w"], np.float32)
    f1b = np.asarray(params["fc1_b"], np.float32)
    f2w = np.asarray(params["fc2_w"], np.float32)
    f2b = np.asarray(params["fc2_b"], np.float32)
    f3w = np.asarray(params["fc3_w"], np.float32)
    f3b = np.asarray(params["fc3_b"], np.float32)

    # C1 fused row taps: w1[di*28 + wi, co*24 + ow] = c1_w[co, 0, di, wi - ow]
    w1 = np.zeros((140, 144), np.float32)
    for co in range(6):
        for di in range(5):
            for dj in range(5):
                for ow in range(24):
                    w1[di * 28 + ow + dj, co * 24 + ow] = c1w[co, 0, di, dj]
    b1 = np.zeros((1, 144), np.float32)
    for co in range(6):
        b1[0, co * 24:(co + 1) * 24] = c1b[co]

    # width half of the pool1 2x2 avg-pool (only used host-side, folded into w2)
    pw1 = np.zeros((144, 72), np.float32)
    for ci in range(6):
        for pw in range(12):
            for dw in range(2):
                pw1[ci * 24 + 2 * pw + dw, ci * 12 + pw] = 0.5

    # C2 row taps on pooled-width lanes, then fold pool1 width matrix in.
    w2 = np.zeros((5, 72, 128), np.float32)
    for co in range(16):
        for ci in range(6):
            for di in range(5):
                for dj in range(5):
                    for ow in range(8):
                        w2[di, ci * 12 + ow + dj, co * 8 + ow] = c2w[co, ci, di, dj]
    w2f = np.einsum("kp,dpn->dkn", pw1, w2)          # (5, 144, 128)
    b2 = np.zeros((1, 128), np.float32)
    for co in range(16):
        b2[0, co * 8:(co + 1) * 8] = c2b[co]

    # pool2 width matrices, one per pooled output row ph, landing each pooled
    # value directly at its flattened lane ph*64 + co*4 + pw (flatten fused).
    pw2 = np.zeros((4, 128, 256), np.float32)
    for ph in range(4):
        for co in range(16):
            for pw in range(4):
                for dw in range(2):
                    pw2[ph, co * 8 + 2 * pw + dw, ph * 64 + co * 4 + pw] = 0.5

    # FC1 consumes the flat (ph*64 + co*4 + pw) layout; torch flat idx = co*16+ph*4+pw
    fw1 = np.zeros((256, 128), np.float32)
    for ph in range(4):
        for co in range(16):
            for pw in range(4):
                fw1[ph * 64 + co * 4 + pw, :120] = f1w[:, co * 16 + ph * 4 + pw]
    fb1 = np.zeros((1, 128), np.float32)
    fb1[0, :120] = f1b

    fw2 = np.zeros((128, 128), np.float32)
    fw2[:120, :84] = f2w.T
    fb2 = np.zeros((1, 128), np.float32)
    fb2[0, :84] = f2b

    fw3 = np.zeros((128, 128), np.float32)
    fw3[:84, :10] = f3w.T
    fb3 = np.full((1, 128), -1e30, np.float32)   # padded logits excluded from softmax
    fb3[0, :10] = f3b

    bf = jnp.bfloat16
    return {
        "w1": jnp.asarray(w1, bf), "b1": jnp.asarray(b1),
        "w2": jnp.asarray(w2f, bf), "b2": jnp.asarray(b2),
        "pw2": jnp.asarray(pw2, bf),
        "fw1": jnp.asarray(fw1, bf), "fb1": jnp.asarray(fb1),
        "fw2": jnp.asarray(fw2, bf), "fb2": jnp.asarray(fb2),
        "fw3": jnp.asarray(fw3, bf), "fb3": jnp.asarray(fb3),
    }


# ----------------------------------------------------------------------------
# Forward pass
# ----------------------------------------------------------------------------
def _round_up(n, m):
    return ((n + m - 1) // m) * m


def lenet5_forward(prep, x):
    # x: (B, 1, 28, 28) float32, NCHW — same contract as LeNet5Torch.forward.
    B = x.shape[0]
    Bpad8 = _round_up(B, 8)
    if Bpad8 >= 16:
        # >= 2 grid steps so the "parallel" batch axis splits across the two
        # v7x TensorCores; tile capped at 256 (fits VMEM on every generation).
        TB = min(256, _round_up((Bpad8 + 1) // 2, 8))
    else:
        TB = Bpad8
    Bpad = _round_up(Bpad8, TB)

    # layout plumbing only: (B,1,28,28) -> (28, Bpad, 28) = (h, b, w), then an
    # im2row over the 5 conv1 kernel rows -> (24, Bpad, 140).
    xt = jnp.transpose(x.reshape(B, 28, 28), (1, 0, 2))
    if Bpad != B:
        xt = jnp.pad(xt, ((0, 0), (0, Bpad - B), (0, 0)))
    xim = jnp.concatenate([xt[di:di + 24] for di in range(5)], axis=-1)  # (24,Bpad,140)

    out = pl.pallas_call(
        _lenet_kernel,
        out_shape=jax.ShapeDtypeStruct((Bpad, 128), jnp.float32),
        grid=(Bpad // TB,),
        in_specs=[
            pl.BlockSpec((24, TB, 140), lambda i: (0, i, 0)),   # x im2row (batch-tiled)
            pl.BlockSpec((140, 144), lambda i: (0, 0)),         # w1 (C1 taps fused)
            pl.BlockSpec((1, 144), lambda i: (0, 0)),           # b1
            pl.BlockSpec((5, 144, 128), lambda i: (0, 0, 0)),   # w2 (pool1 folded in)
            pl.BlockSpec((1, 128), lambda i: (0, 0)),           # b2
            pl.BlockSpec((4, 128, 256), lambda i: (0, 0, 0)),   # pool2 width + flatten
            pl.BlockSpec((256, 128), lambda i: (0, 0)),         # fc1
            pl.BlockSpec((1, 128), lambda i: (0, 0)),           # fc1 bias
            pl.BlockSpec((128, 128), lambda i: (0, 0)),         # fc2
            pl.BlockSpec((1, 128), lambda i: (0, 0)),           # fc2 bias
            pl.BlockSpec((128, 128), lambda i: (0, 0)),         # fc3
            pl.BlockSpec((1, 128), lambda i: (0, 0)),           # fc3 bias (+mask)
        ],
        out_specs=pl.BlockSpec((TB, 128), lambda i: (i, 0)),
        compiler_params=pltpu.CompilerParams(
            dimension_semantics=("parallel",),
            vmem_limit_bytes=32 * 1024 * 1024),
    )(xim, prep["w1"], prep["b1"], prep["w2"], prep["b2"], prep["pw2"],
      prep["fw1"], prep["fb1"], prep["fw2"], prep["fb2"],
      prep["fw3"], prep["fb3"])

    return out[:B, :10]                       # (B, 10), rows sum to 1


if __name__ == "__main__":
    key = jax.random.PRNGKey(0)
    k_params, k_x = jax.random.split(key)
    params = init_params(k_params)
    prep = prepare_params(params)             # one-time weight re-layout

    B = 2                                     # LeNet-5 needs 1x28x28 inputs
    x = jax.random.normal(k_x, (B, 1, 28, 28), jnp.float32)

    fwd = jax.jit(lenet5_forward)
    out = jax.block_until_ready(fwd(prep, x))

    assert out.shape == (B, 10)
    assert bool(jnp.all(jnp.isfinite(out)))
    assert bool(jnp.allclose(jnp.sum(out, axis=-1), 1.0, atol=1e-5))
    print("KERNEL_OK")
</pallas_src>

<mosaic_0001>
module attributes {stable_mosaic.version = 11 : i64} {
  func.func @_lenet_kernel(%arg0: i32, %arg1: memref<24x8x140xf32, #tpu.memory_space<vmem>>, %arg2: memref<140x144xbf16, #tpu.memory_space<vmem>>, %arg3: memref<1x144xf32, #tpu.memory_space<vmem>>, %arg4: memref<5x144x128xbf16, #tpu.memory_space<vmem>>, %arg5: memref<1x128xf32, #tpu.memory_space<vmem>>, %arg6: memref<4x128x256xbf16, #tpu.memory_space<vmem>>, %arg7: memref<256x128xbf16, #tpu.memory_space<vmem>>, %arg8: memref<1x128xf32, #tpu.memory_space<vmem>>, %arg9: memref<128x128xbf16, #tpu.memory_space<vmem>>, %arg10: memref<1x128xf32, #tpu.memory_space<vmem>>, %arg11: memref<128x128xbf16, #tpu.memory_space<vmem>>, %arg12: memref<1x128xf32, #tpu.memory_space<vmem>>, %arg13: memref<8x128xf32, #tpu.memory_space<vmem>>) attributes {dimension_semantics = [#tpu.dimension_semantics<parallel>], iteration_bounds = array<i64: 1>, scalar_prefetch = 0 : i64, scratch_operands = 0 : i64, tpu.core_type = #tpu.core_type<tc>, window_params = [{transform_indices = @transform_0, window_bounds = array<i64: 24, 8, 140>}, {pipeline_mode = #tpu.pipeline_mode<synchronous>, transform_indices = @transform_1, window_bounds = array<i64: 140, 144>}, {pipeline_mode = #tpu.pipeline_mode<synchronous>, transform_indices = @transform_2, window_bounds = array<i64: 1, 144>}, {pipeline_mode = #tpu.pipeline_mode<synchronous>, transform_indices = @transform_3, window_bounds = array<i64: 5, 144, 128>}, {pipeline_mode = #tpu.pipeline_mode<synchronous>, transform_indices = @transform_4, window_bounds = array<i64: 1, 128>}, {pipeline_mode = #tpu.pipeline_mode<synchronous>, transform_indices = @transform_5, window_bounds = array<i64: 4, 128, 256>}, {pipeline_mode = #tpu.pipeline_mode<synchronous>, transform_indices = @transform_6, window_bounds = array<i64: 256, 128>}, {pipeline_mode = #tpu.pipeline_mode<synchronous>, transform_indices = @transform_7, window_bounds = array<i64: 1, 128>}, {pipeline_mode = #tpu.pipeline_mode<synchronous>, transform_indices = @transform_8, window_bounds = array<i64: 128, 128>}, {pipeline_mode = #tpu.pipeline_mode<synchronous>, transform_indices = @transform_9, window_bounds = array<i64: 1, 128>}, {pipeline_mode = #tpu.pipeline_mode<synchronous>, transform_indices = @transform_10, window_bounds = array<i64: 128, 128>}, {pipeline_mode = #tpu.pipeline_mode<synchronous>, transform_indices = @transform_11, window_bounds = array<i64: 1, 128>}, {transform_indices = @transform_12, window_bounds = array<i64: 8, 128>}]} {
    %c0 = arith.constant 0 : index
    %c0_0 = arith.constant 0 : index
    %c0_1 = arith.constant 0 : index
    %0 = vector.load %arg1[%c0, %c0_0, %c0_1] : memref<24x8x140xf32, #tpu.memory_space<vmem>>, vector<24x8x140xf32>
    %1 = vector.shape_cast %0 : vector<24x8x140xf32> to vector<192x140xf32>
    %2 = arith.truncf %1 : vector<192x140xf32> to vector<192x140xbf16>
    %c0_2 = arith.constant 0 : index
    %c0_3 = arith.constant 0 : index
    %3 = vector.load %arg2[%c0_2, %c0_3] : memref<140x144xbf16, #tpu.memory_space<vmem>>, vector<140x144xbf16>
    %cst = arith.constant dense<0.000000e+00> : vector<192x144xf32>
    %4 = tpu.matmul %2, %3, %cst {dimension_numbers = #tpu.dot_dimension_numbers<[1], [0], [0], [1], [0, 0, 1, 1], [], []>} : vector<192x140xbf16>, vector<140x144xbf16>, vector<192x144xf32> -> vector<192x144xf32>
    %c0_4 = arith.constant 0 : index
    %c0_5 = arith.constant 0 : index
    %5 = vector.load %arg3[%c0_4, %c0_5] : memref<1x144xf32, #tpu.memory_space<vmem>>, vector<1x144xf32>
    %6 = vector.broadcast %5 : vector<1x144xf32> to vector<192x144xf32>
    %7 = arith.addf %4, %6 : vector<192x144xf32>
    %8 = math.tanh %7 : vector<192x144xf32>
    %9 = vector.shape_cast %8 : vector<192x144xf32> to vector<12x2x8x144xf32>
    %10 = vector.extract_strided_slice %9 {offsets = [0, 0, 0, 0], sizes = [12, 1, 8, 144], strides = [1, 1, 1, 1]} : vector<12x2x8x144xf32> to vector<12x1x8x144xf32>
    %11 = vector.shape_cast %10 : vector<12x1x8x144xf32> to vector<12x8x144xf32>
    %12 = vector.extract_strided_slice %9 {offsets = [0, 1, 0, 0], sizes = [12, 1, 8, 144], strides = [1, 1, 1, 1]} : vector<12x2x8x144xf32> to vector<12x1x8x144xf32>
    %13 = vector.shape_cast %12 : vector<12x1x8x144xf32> to vector<12x8x144xf32>
    %14 = arith.addf %11, %13 : vector<12x8x144xf32>
    %cst_6 = arith.constant 5.000000e-01 : f32
    %15 = vector.broadcast %cst_6 : f32 to vector<12x8x144xf32>
    %16 = arith.mulf %15, %14 : vector<12x8x144xf32>
    %17 = vector.extract_strided_slice %16 {offsets = [0, 0, 0], sizes = [8, 8, 144], strides = [1, 1, 1]} : vector<12x8x144xf32> to vector<8x8x144xf32>
    %18 = vector.shape_cast %17 : vector<8x8x144xf32> to vector<64x144xf32>
    %19 = arith.truncf %18 : vector<64x144xf32> to vector<64x144xbf16>
    %c0_7 = arith.constant 0 : index
    %c0_8 = arith.constant 0 : index
    %c0_9 = arith.constant 0 : index
    %20 = vector.load %arg4[%c0_7, %c0_8, %c0_9] : memref<5x144x128xbf16, #tpu.memory_space<vmem>>, vector<1x144x128xbf16>
    %21 = vector.shape_cast %20 : vector<1x144x128xbf16> to vector<144x128xbf16>
    %cst_10 = arith.constant dense<0.000000e+00> : vector<64x128xf32>
    %22 = tpu.matmul %19, %21, %cst_10 {dimension_numbers = #tpu.dot_dimension_numbers<[1], [0], [0], [1], [0, 0, 1, 1], [], []>} : vector<64x144xbf16>, vector<144x128xbf16>, vector<64x128xf32> -> vector<64x128xf32>
    %23 = vector.extract_strided_slice %16 {offsets = [1, 0, 0], sizes = [8, 8, 144], strides = [1, 1, 1]} : vector<12x8x144xf32> to vector<8x8x144xf32>
    %24 = vector.shape_cast %23 : vector<8x8x144xf32> to vector<64x144xf32>
    %25 = arith.truncf %24 : vector<64x144xf32> to vector<64x144xbf16>
    %c1 = arith.constant 1 : index
    %c0_11 = arith.constant 0 : index
    %c0_12 = arith.constant 0 : index
    %26 = vector.load %arg4[%c1, %c0_11, %c0_12] : memref<5x144x128xbf16, #tpu.memory_space<vmem>>, vector<1x144x128xbf16>
    %27 = vector.shape_cast %26 : vector<1x144x128xbf16> to vector<144x128xbf16>
    %cst_13 = arith.constant dense<0.000000e+00> : vector<64x128xf32>
    %28 = tpu.matmul %25, %27, %cst_13 {dimension_numbers = #tpu.dot_dimension_numbers<[1], [0], [0], [1], [0, 0, 1, 1], [], []>} : vector<64x144xbf16>, vector<144x128xbf16>, vector<64x128xf32> -> vector<64x128xf32>
    %29 = arith.addf %22, %28 : vector<64x128xf32>
    %30 = vector.extract_strided_slice %16 {offsets = [2, 0, 0], sizes = [8, 8, 144], strides = [1, 1, 1]} : vector<12x8x144xf32> to vector<8x8x144xf32>
    %31 = vector.shape_cast %30 : vector<8x8x144xf32> to vector<64x144xf32>
    %32 = arith.truncf %31 : vector<64x144xf32> to vector<64x144xbf16>
    %c2 = arith.constant 2 : index
    %c0_14 = arith.constant 0 : index
    %c0_15 = arith.constant 0 : index
    %33 = vector.load %arg4[%c2, %c0_14, %c0_15] : memref<5x144x128xbf16, #tpu.memory_space<vmem>>, vector<1x144x128xbf16>
    %34 = vector.shape_cast %33 : vector<1x144x128xbf16> to vector<144x128xbf16>
    %cst_16 = arith.constant dense<0.000000e+00> : vector<64x128xf32>
    %35 = tpu.matmul %32, %34, %cst_16 {dimension_numbers = #tpu.dot_dimension_numbers<[1], [0], [0], [1], [0, 0, 1, 1], [], []>} : vector<64x144xbf16>, vector<144x128xbf16>, vector<64x128xf32> -> vector<64x128xf32>
    %36 = arith.addf %29, %35 : vector<64x128xf32>
    %37 = vector.extract_strided_slice %16 {offsets = [3, 0, 0], sizes = [8, 8, 144], strides = [1, 1, 1]} : vector<12x8x144xf32> to vector<8x8x144xf32>
    %38 = vector.shape_cast %37 : vector<8x8x144xf32> to vector<64x144xf32>
    %39 = arith.truncf %38 : vector<64x144xf32> to vector<64x144xbf16>
    %c3 = arith.constant 3 : index
    %c0_17 = arith.constant 0 : index
    %c0_18 = arith.constant 0 : index
    %40 = vector.load %arg4[%c3, %c0_17, %c0_18] : memref<5x144x128xbf16, #tpu.memory_space<vmem>>, vector<1x144x128xbf16>
    %41 = vector.shape_cast %40 : vector<1x144x128xbf16> to vector<144x128xbf16>
    %cst_19 = arith.constant dense<0.000000e+00> : vector<64x128xf32>
    %42 = tpu.matmul %39, %41, %cst_19 {dimension_numbers = #tpu.dot_dimension_numbers<[1], [0], [0], [1], [0, 0, 1, 1], [], []>} : vector<64x144xbf16>, vector<144x128xbf16>, vector<64x128xf32> -> vector<64x128xf32>
    %43 = arith.addf %36, %42 : vector<64x128xf32>
    %44 = vector.extract_strided_slice %16 {offsets = [4, 0, 0], sizes = [8, 8, 144], strides = [1, 1, 1]} : vector<12x8x144xf32> to vector<8x8x144xf32>
    %45 = vector.shape_cast %44 : vector<8x8x144xf32> to vector<64x144xf32>
    %46 = arith.truncf %45 : vector<64x144xf32> to vector<64x144xbf16>
    %c4 = arith.constant 4 : index
    %c0_20 = arith.constant 0 : index
    %c0_21 = arith.constant 0 : index
    %47 = vector.load %arg4[%c4, %c0_20, %c0_21] : memref<5x144x128xbf16, #tpu.memory_space<vmem>>, vector<1x144x128xbf16>
    %48 = vector.shape_cast %47 : vector<1x144x128xbf16> to vector<144x128xbf16>
    %cst_22 = arith.constant dense<0.000000e+00> : vector<64x128xf32>
    %49 = tpu.matmul %46, %48, %cst_22 {dimension_numbers = #tpu.dot_dimension_numbers<[1], [0], [0], [1], [0, 0, 1, 1], [], []>} : vector<64x144xbf16>, vector<144x128xbf16>, vector<64x128xf32> -> vector<64x128xf32>
    %50 = arith.addf %43, %49 : vector<64x128xf32>
    %c0_23 = arith.constant 0 : index
    %c0_24 = arith.constant 0 : index
    %51 = vector.load %arg5[%c0_23, %c0_24] : memref<1x128xf32, #tpu.memory_space<vmem>>, vector<1x128xf32>
    %52 = vector.broadcast %51 : vector<1x128xf32> to vector<64x128xf32>
    %53 = arith.addf %50, %52 : vector<64x128xf32>
    %54 = math.tanh %53 : vector<64x128xf32>
    %55 = vector.shape_cast %54 : vector<64x128xf32> to vector<4x2x8x128xf32>
    %56 = vector.extract_strided_slice %55 {offsets = [0, 0, 0, 0], sizes = [1, 1, 8, 128], strides = [1, 1, 1, 1]} : vector<4x2x8x128xf32> to vector<1x1x8x128xf32>
    %57 = vector.shape_cast %56 : vector<1x1x8x128xf32> to vector<8x128xf32>
    %58 = vector.extract_strided_slice %55 {offsets = [0, 1, 0, 0], sizes = [1, 1, 8, 128], strides = [1, 1, 1, 1]} : vector<4x2x8x128xf32> to vector<1x1x8x128xf32>
    %59 = vector.shape_cast %58 : vector<1x1x8x128xf32> to vector<8x128xf32>
    %60 = arith.addf %57, %59 : vector<8x128xf32>
    %cst_25 = arith.constant 5.000000e-01 : f32
    %61 = vector.broadcast %cst_25 : f32 to vector<8x128xf32>
    %62 = arith.mulf %61, %60 : vector<8x128xf32>
    %63 = arith.truncf %62 : vector<8x128xf32> to vector<8x128xbf16>
    %c0_26 = arith.constant 0 : index
    %c0_27 = arith.constant 0 : index
    %c0_28 = arith.constant 0 : index
    %64 = vector.load %arg6[%c0_26, %c0_27, %c0_28] : memref<4x128x256xbf16, #tpu.memory_space<vmem>>, vector<1x128x256xbf16>
    %65 = vector.shape_cast %64 : vector<1x128x256xbf16> to vector<128x256xbf16>
    %cst_29 = arith.constant dense<0.000000e+00> : vector<8x256xf32>
    %66 = tpu.matmul %63, %65, %cst_29 {dimension_numbers = #tpu.dot_dimension_numbers<[1], [0], [0], [1], [0, 0, 1, 1], [], []>} : vector<8x128xbf16>, vector<128x256xbf16>, vector<8x256xf32> -> vector<8x256xf32>
    %67 = vector.extract_strided_slice %55 {offsets = [1, 0, 0, 0], sizes = [1, 1, 8, 128], strides = [1, 1, 1, 1]} : vector<4x2x8x128xf32> to vector<1x1x8x128xf32>
    %68 = vector.shape_cast %67 : vector<1x1x8x128xf32> to vector<8x128xf32>
    %69 = vector.extract_strided_slice %55 {offsets = [1, 1, 0, 0], sizes = [1, 1, 8, 128], strides = [1, 1, 1, 1]} : vector<4x2x8x128xf32> to vector<1x1x8x128xf32>
    %70 = vector.shape_cast %69 : vector<1x1x8x128xf32> to vector<8x128xf32>
    %71 = arith.addf %68, %70 : vector<8x128xf32>
    %cst_30 = arith.constant 5.000000e-01 : f32
    %72 = vector.broadcast %cst_30 : f32 to vector<8x128xf32>
    %73 = arith.mulf %72, %71 : vector<8x128xf32>
    %74 = arith.truncf %73 : vector<8x128xf32> to vector<8x128xbf16>
    %c1_31 = arith.constant 1 : index
    %c0_32 = arith.constant 0 : index
    %c0_33 = arith.constant 0 : index
    %75 = vector.load %arg6[%c1_31, %c0_32, %c0_33] : memref<4x128x256xbf16, #tpu.memory_space<vmem>>, vector<1x128x256xbf16>
    %76 = vector.shape_cast %75 : vector<1x128x256xbf16> to vector<128x256xbf16>
    %cst_34 = arith.constant dense<0.000000e+00> : vector<8x256xf32>
    %77 = tpu.matmul %74, %76, %cst_34 {dimension_numbers = #tpu.dot_dimension_numbers<[1], [0], [0], [1], [0, 0, 1, 1], [], []>} : vector<8x128xbf16>, vector<128x256xbf16>, vector<8x256xf32> -> vector<8x256xf32>
    %78 = arith.addf %66, %77 : vector<8x256xf32>
    %79 = vector.extract_strided_slice %55 {offsets = [2, 0, 0, 0], sizes = [1, 1, 8, 128], strides = [1, 1, 1, 1]} : vector<4x2x8x128xf32> to vector<1x1x8x128xf32>
    %80 = vector.shape_cast %79 : vector<1x1x8x128xf32> to vector<8x128xf32>
    %81 = vector.extract_strided_slice %55 {offsets = [2, 1, 0, 0], sizes = [1, 1, 8, 128], strides = [1, 1, 1, 1]} : vector<4x2x8x128xf32> to vector<1x1x8x128xf32>
    %82 = vector.shape_cast %81 : vector<1x1x8x128xf32> to vector<8x128xf32>
    %83 = arith.addf %80, %82 : vector<8x128xf32>
    %cst_35 = arith.constant 5.000000e-01 : f32
    %84 = vector.broadcast %cst_35 : f32 to vector<8x128xf32>
    %85 = arith.mulf %84, %83 : vector<8x128xf32>
    %86 = arith.truncf %85 : vector<8x128xf32> to vector<8x128xbf16>
    %c2_36 = arith.constant 2 : index
    %c0_37 = arith.constant 0 : index
    %c0_38 = arith.constant 0 : index
    %87 = vector.load %arg6[%c2_36, %c0_37, %c0_38] : memref<4x128x256xbf16, #tpu.memory_space<vmem>>, vector<1x128x256xbf16>
    %88 = vector.shape_cast %87 : vector<1x128x256xbf16> to vector<128x256xbf16>
    %cst_39 = arith.constant dense<0.000000e+00> : vector<8x256xf32>
    %89 = tpu.matmul %86, %88, %cst_39 {dimension_numbers = #tpu.dot_dimension_numbers<[1], [0], [0], [1], [0, 0, 1, 1], [], []>} : vector<8x128xbf16>, vector<128x256xbf16>, vector<8x256xf32> -> vector<8x256xf32>
    %90 = arith.addf %78, %89 : vector<8x256xf32>
    %91 = vector.extract_strided_slice %55 {offsets = [3, 0, 0, 0], sizes = [1, 1, 8, 128], strides = [1, 1, 1, 1]} : vector<4x2x8x128xf32> to vector<1x1x8x128xf32>
    %92 = vector.shape_cast %91 : vector<1x1x8x128xf32> to vector<8x128xf32>
    %93 = vector.extract_strided_slice %55 {offsets = [3, 1, 0, 0], sizes = [1, 1, 8, 128], strides = [1, 1, 1, 1]} : vector<4x2x8x128xf32> to vector<1x1x8x128xf32>
    %94 = vector.shape_cast %93 : vector<1x1x8x128xf32> to vector<8x128xf32>
    %95 = arith.addf %92, %94 : vector<8x128xf32>
    %cst_40 = arith.constant 5.000000e-01 : f32
    %96 = vector.broadcast %cst_40 : f32 to vector<8x128xf32>
    %97 = arith.mulf %96, %95 : vector<8x128xf32>
    %98 = arith.truncf %97 : vector<8x128xf32> to vector<8x128xbf16>
    %c3_41 = arith.constant 3 : index
    %c0_42 = arith.constant 0 : index
    %c0_43 = arith.constant 0 : index
    %99 = vector.load %arg6[%c3_41, %c0_42, %c0_43] : memref<4x128x256xbf16, #tpu.memory_space<vmem>>, vector<1x128x256xbf16>
    %100 = vector.shape_cast %99 : vector<1x128x256xbf16> to vector<128x256xbf16>
    %cst_44 = arith.constant dense<0.000000e+00> : vector<8x256xf32>
    %101 = tpu.matmul %98, %100, %cst_44 {dimension_numbers = #tpu.dot_dimension_numbers<[1], [0], [0], [1], [0, 0, 1, 1], [], []>} : vector<8x128xbf16>, vector<128x256xbf16>, vector<8x256xf32> -> vector<8x256xf32>
    %102 = arith.addf %90, %101 : vector<8x256xf32>
    %103 = math.tanh %102 : vector<8x256xf32>
    %104 = arith.truncf %103 : vector<8x256xf32> to vector<8x256xbf16>
    %c0_45 = arith.constant 0 : index
    %c0_46 = arith.constant 0 : index
    %105 = vector.load %arg7[%c0_45, %c0_46] : memref<256x128xbf16, #tpu.memory_space<vmem>>, vector<256x128xbf16>
    %cst_47 = arith.constant dense<0.000000e+00> : vector<8x128xf32>
    %106 = tpu.matmul %104, %105, %cst_47 {dimension_numbers = #tpu.dot_dimension_numbers<[1], [0], [0], [1], [0, 0, 1, 1], [], []>} : vector<8x256xbf16>, vector<256x128xbf16>, vector<8x128xf32> -> vector<8x128xf32>
    %c0_48 = arith.constant 0 : index
    %c0_49 = arith.constant 0 : index
    %107 = vector.load %arg8[%c0_48, %c0_49] : memref<1x128xf32, #tpu.memory_space<vmem>>, vector<1x128xf32>
    %108 = vector.broadcast %107 : vector<1x128xf32> to vector<8x128xf32>
    %109 = arith.addf %106, %108 : vector<8x128xf32>
    %110 = math.tanh %109 : vector<8x128xf32>
    %111 = arith.truncf %110 : vector<8x128xf32> to vector<8x128xbf16>
    %c0_50 = arith.constant 0 : index
    %c0_51 = arith.constant 0 : index
    %112 = vector.load %arg9[%c0_50, %c0_51] : memref<128x128xbf16, #tpu.memory_space<vmem>>, vector<128x128xbf16>
    %cst_52 = arith.constant dense<0.000000e+00> : vector<8x128xf32>
    %113 = tpu.matmul %111, %112, %cst_52 {dimension_numbers = #tpu.dot_dimension_numbers<[1], [0], [0], [1], [0, 0, 1, 1], [], []>} : vector<8x128xbf16>, vector<128x128xbf16>, vector<8x128xf32> -> vector<8x128xf32>
    %c0_53 = arith.constant 0 : index
    %c0_54 = arith.constant 0 : index
    %114 = vector.load %arg10[%c0_53, %c0_54] : memref<1x128xf32, #tpu.memory_space<vmem>>, vector<1x128xf32>
    %115 = vector.broadcast %114 : vector<1x128xf32> to vector<8x128xf32>
    %116 = arith.addf %113, %115 : vector<8x128xf32>
    %117 = math.tanh %116 : vector<8x128xf32>
    %118 = arith.truncf %117 : vector<8x128xf32> to vector<8x128xbf16>
    %c0_55 = arith.constant 0 : index
    %c0_56 = arith.constant 0 : index
    %119 = vector.load %arg11[%c0_55, %c0_56] : memref<128x128xbf16, #tpu.memory_space<vmem>>, vector<128x128xbf16>
    %cst_57 = arith.constant dense<0.000000e+00> : vector<8x128xf32>
    %120 = tpu.matmul %118, %119, %cst_57 {dimension_numbers = #tpu.dot_dimension_numbers<[1], [0], [0], [1], [0, 0, 1, 1], [], []>} : vector<8x128xbf16>, vector<128x128xbf16>, vector<8x128xf32> -> vector<8x128xf32>
    %c0_58 = arith.constant 0 : index
    %c0_59 = arith.constant 0 : index
    %121 = vector.load %arg12[%c0_58, %c0_59] : memref<1x128xf32, #tpu.memory_space<vmem>>, vector<1x128xf32>
    %122 = vector.broadcast %121 : vector<1x128xf32> to vector<8x128xf32>
    %123 = arith.addf %120, %122 : vector<8x128xf32>
    %cst_60 = arith.constant dense<0xFF800000> : vector<8xf32>
    %124 = vector.multi_reduction <maximumf>, %123, %cst_60 [1] : vector<8x128xf32> to vector<8xf32>
    %125 = vector.shape_cast %124 : vector<8xf32> to vector<8x1xf32>
    %126 = vector.broadcast %125 : vector<8x1xf32> to vector<8x128xf32>
    %127 = arith.subf %123, %126 : vector<8x128xf32>
    %128 = math.exp %127 : vector<8x128xf32>
    %cst_61 = arith.constant dense<0.000000e+00> : vector<8xf32>
    %129 = vector.multi_reduction <add>, %128, %cst_61 [1] : vector<8x128xf32> to vector<8xf32>
    %130 = vector.shape_cast %129 : vector<8xf32> to vector<8x1xf32>
    %131 = tpu.reciprocal %130 {approx = true} : vector<8x1xf32> -> vector<8x1xf32>
    %132 = arith.mulf %130, %131 : vector<8x1xf32>
    %cst_62 = arith.constant 2.000000e+00 : f32
    %133 = vector.broadcast %cst_62 : f32 to vector<8x1xf32>
    %134 = arith.subf %133, %132 : vector<8x1xf32>
    %135 = arith.mulf %131, %134 : vector<8x1xf32>
    %136 = vector.broadcast %135 : vector<8x1xf32> to vector<8x128xf32>
    %137 = arith.mulf %128, %136 : vector<8x128xf32>
    %c0_63 = arith.constant 0 : index
    %c0_64 = arith.constant 0 : index
    %138 = vector.load %arg13[%c0_63, %c0_64] : memref<8x128xf32, #tpu.memory_space<vmem>>, vector<8x128xf32>
    tpu.vector_store %arg13[%c0_63, %c0_64], %137 {strides = array<i32>} : memref<8x128xf32, #tpu.memory_space<vmem>>, vector<8x128xf32>,
    return
  }
  func.func @transform_0(%arg0: i32) -> (i32, i32, i32) {
    %c0_i32 = arith.constant 0 : i32
    %c0_i32_0 = arith.constant 0 : i32
    %c0_i32_1 = arith.constant 0 : i32
    return %c0_i32, %arg0, %c0_i32_0 : i32, i32, i32
  }
  func.func @transform_1(%arg0: i32) -> (i32, i32) {
    %c0_i32 = arith.constant 0 : i32
    %c0_i32_0 = arith.constant 0 : i32
    %c0_i32_1 = arith.constant 0 : i32
    return %c0_i32, %c0_i32_0 : i32, i32
  }
  func.func @transform_2(%arg0: i32) -> (i32, i32) {
    %c0_i32 = arith.constant 0 : i32
    %c0_i32_0 = arith.constant 0 : i32
    %c0_i32_1 = arith.constant 0 : i32
    return %c0_i32, %c0_i32_0 : i32, i32
  }
  func.func @transform_3(%arg0: i32) -> (i32, i32, i32) {
    %c0_i32 = arith.constant 0 : i32
    %c0_i32_0 = arith.constant 0 : i32
    %c0_i32_1 = arith.constant 0 : i32
    %c0_i32_2 = arith.constant 0 : i32
    return %c0_i32, %c0_i32_0, %c0_i32_1 : i32, i32, i32
  }
  func.func @transform_4(%arg0: i32) -> (i32, i32) {
    %c0_i32 = arith.constant 0 : i32
    %c0_i32_0 = arith.constant 0 : i32
    %c0_i32_1 = arith.constant 0 : i32
    return %c0_i32, %c0_i32_0 : i32, i32
  }
  func.func @transform_5(%arg0: i32) -> (i32, i32, i32) {
    %c0_i32 = arith.constant 0 : i32
    %c0_i32_0 = arith.constant 0 : i32
    %c0_i32_1 = arith.constant 0 : i32
    %c0_i32_2 = arith.constant 0 : i32
    return %c0_i32, %c0_i32_0, %c0_i32_1 : i32, i32, i32
  }
  func.func @transform_6(%arg0: i32) -> (i32, i32) {
    %c0_i32 = arith.constant 0 : i32
    %c0_i32_0 = arith.constant 0 : i32
    %c0_i32_1 = arith.constant 0 : i32
    return %c0_i32, %c0_i32_0 : i32, i32
  }
  func.func @transform_7(%arg0: i32) -> (i32, i32) {
    %c0_i32 = arith.constant 0 : i32
    %c0_i32_0 = arith.constant 0 : i32
    %c0_i32_1 = arith.constant 0 : i32
    return %c0_i32, %c0_i32_0 : i32, i32
  }
  func.func @transform_8(%arg0: i32) -> (i32, i32) {
    %c0_i32 = arith.constant 0 : i32
    %c0_i32_0 = arith.constant 0 : i32
    %c0_i32_1 = arith.constant 0 : i32
    return %c0_i32, %c0_i32_0 : i32, i32
  }
  func.func @transform_9(%arg0: i32) -> (i32, i32) {
    %c0_i32 = arith.constant 0 : i32
    %c0_i32_0 = arith.constant 0 : i32
    %c0_i32_1 = arith.constant 0 : i32
    return %c0_i32, %c0_i32_0 : i32, i32
  }
  func.func @transform_10(%arg0: i32) -> (i32, i32) {
    %c0_i32 = arith.constant 0 : i32
    %c0_i32_0 = arith.constant 0 : i32
    %c0_i32_1 = arith.constant 0 : i32
    return %c0_i32, %c0_i32_0 : i32, i32
  }
  func.func @transform_11(%arg0: i32) -> (i32, i32) {
    %c0_i32 = arith.constant 0 : i32
    %c0_i32_0 = arith.constant 0 : i32
    %c0_i32_1 = arith.constant 0 : i32
    return %c0_i32, %c0_i32_0 : i32, i32
  }
  func.func @transform_12(%arg0: i32) -> (i32, i32) {
    %c0_i32 = arith.constant 0 : i32
    %c0_i32_0 = arith.constant 0 : i32
    return %arg0, %c0_i32 : i32, i32
  }
}

</mosaic_0001>

<llo_original>
// kernel: lenet5_forward.1
$region0: #{lenet5_forward.1}
  #allocation0 [shape = 'u32[]', space=smem, size = 0x4, offset = 0x4, fixed_abs, tag = 'smem constant byte address 0x4 - core index']
  #allocation1 [shape = 'u32[144,128]{1,0:T(1,128)}', space=vmem, size = 0x12000, scoped, tag = 'internal scratch']
  %s0 = inlined_call_operand.vmem [shape: f32[24,8,140], index: 0, kind: input, shape index: {}]
  %s1 = inlined_call_operand.vmem [shape: bf16[140,144], index: 1, kind: input, shape index: {}]
  %s2 = inlined_call_operand.vmem [shape: f32[1,144], index: 2, kind: input, shape index: {}]
  %s3 = inlined_call_operand.vmem [shape: bf16[5,144,128], index: 3, kind: input, shape index: {}]
  %s4 = inlined_call_operand.vmem [shape: f32[1,128], index: 4, kind: input, shape index: {}]
  %s5 = inlined_call_operand.vmem [shape: bf16[4,128,256], index: 5, kind: input, shape index: {}]
  %s6 = inlined_call_operand.vmem [shape: bf16[256,128], index: 6, kind: input, shape index: {}]
  %s7 = inlined_call_operand.vmem [shape: f32[1,128], index: 7, kind: input, shape index: {}]
  %s8 = inlined_call_operand.vmem [shape: bf16[128,128], index: 8, kind: input, shape index: {}]
  %s9 = inlined_call_operand.vmem [shape: f32[1,128], index: 9, kind: input, shape index: {}]
  %s10 = inlined_call_operand.vmem [shape: bf16[128,128], index: 10, kind: input, shape index: {}]
  %s11 = inlined_call_operand.vmem [shape: f32[1,128], index: 11, kind: input, shape index: {}]
  %s12 = inlined_call_operand.vmem [shape: f32[8,128], index: 12, kind: output, shape index: {}]
  %s13 = sld [smem:[#allocation0]]
  $region58: #{lenet5_forward.1} parent=0
    _
  %s15 = ssub.s32 1, %s13
  %s16 = scalar_select 0, %s15, %s13
  // Predicated region
  $region2: #{lenet5_forward.1} parent=0 // pred_check
    _
  $region3: #{lenet5_forward.1} parent=0 // pred_check_branch
    %18 = sbr.rel (0) target = $region5
  $region4: #{lenet5_forward.1} parent=0 // pred_region
    _
  $region5: #{lenet5_forward.1} parent=0 // pred_fallthru
    _
  // Predicated region
  $region6: #{lenet5_forward.1} parent=0 // pred_check
    _
  $region7: #{lenet5_forward.1} parent=0 // pred_check_branch
    %20 = sbr.rel (0) target = $region9
  $region8: #{lenet5_forward.1} parent=0 // pred_region
    _
  $region9: #{lenet5_forward.1} parent=0 // pred_fallthru
    _
  // Predicated region
  $region10: #{lenet5_forward.1} parent=0 // pred_check
    _
  $region11: #{lenet5_forward.1} parent=0 // pred_check_branch
    %22 = sbr.rel (0) target = $region13
  $region12: #{lenet5_forward.1} parent=0 // pred_region
    _
  $region13: #{lenet5_forward.1} parent=0 // pred_fallthru
    _
  // Predicated region
  $region14: #{lenet5_forward.1} parent=0 // pred_check
    _
  $region15: #{lenet5_forward.1} parent=0 // pred_check_branch
    %24 = sbr.rel (0) target = $region17
  $region16: #{lenet5_forward.1} parent=0 // pred_region
    _
  $region17: #{lenet5_forward.1} parent=0 // pred_fallthru
    _
  // Predicated region
  $region18: #{lenet5_forward.1} parent=0 // pred_check
    _
  $region19: #{lenet5_forward.1} parent=0 // pred_check_branch
    %26 = sbr.rel (0) target = $region21
  $region20: #{lenet5_forward.1} parent=0 // pred_region
    _
  $region21: #{lenet5_forward.1} parent=0 // pred_fallthru
    _
  // Predicated region
  $region22: #{lenet5_forward.1} parent=0 // pred_check
    _
  $region23: #{lenet5_forward.1} parent=0 // pred_check_branch
    %28 = sbr.rel (0) target = $region25
  $region24: #{lenet5_forward.1} parent=0 // pred_region
    _
  $region25: #{lenet5_forward.1} parent=0 // pred_fallthru
    _
  // Predicated region
  $region26: #{lenet5_forward.1} parent=0 // pred_check
    _
  $region27: #{lenet5_forward.1} parent=0 // pred_check_branch
    %30 = sbr.rel (0) target = $region29
  $region28: #{lenet5_forward.1} parent=0 // pred_region
    _
  $region29: #{lenet5_forward.1} parent=0 // pred_fallthru
    _
  // Predicated region
  $region30: #{lenet5_forward.1} parent=0 // pred_check
    _
  $region31: #{lenet5_forward.1} parent=0 // pred_check_branch
    %32 = sbr.rel (0) target = $region33
  $region32: #{lenet5_forward.1} parent=0 // pred_region
    _
  $region33: #{lenet5_forward.1} parent=0 // pred_fallthru
    _
  // Predicated region
  $region34: #{lenet5_forward.1} parent=0 // pred_check
    _
  $region35: #{lenet5_forward.1} parent=0 // pred_check_branch
    %34 = sbr.rel (0) target = $region37
  $region36: #{lenet5_forward.1} parent=0 // pred_region
    _
  $region37: #{lenet5_forward.1} parent=0 // pred_fallthru
    _
  // Predicated region
  $region38: #{lenet5_forward.1} parent=0 // pred_check
    _
  $region39: #{lenet5_forward.1} parent=0 // pred_check_branch
    %36 = sbr.rel (0) target = $region41
  $region40: #{lenet5_forward.1} parent=0 // pred_region
    _
  $region41: #{lenet5_forward.1} parent=0 // pred_fallthru
    _
  // Predicated region
  $region42: #{lenet5_forward.1} parent=0 // pred_check
    _
  $region43: #{lenet5_forward.1} parent=0 // pred_check_branch
    %38 = sbr.rel (0) target = $region45
  $region44: #{lenet5_forward.1} parent=0 // pred_region
    _
  $region45: #{lenet5_forward.1} parent=0 // pred_fallthru
    _
  // Predicated region
  $region46: #{lenet5_forward.1} parent=0 // pred_check
    _
  $region47: #{lenet5_forward.1} parent=0 // pred_check_branch
    %40 = sbr.rel (0) target = $region49
  $region48: #{lenet5_forward.1} parent=0 // pred_region
    _
  $region49: #{lenet5_forward.1} parent=0 // pred_fallthru
    _
  %v42 = vld [vmem:[%s0] sm:$0xff]
  %v43 = vld [vmem:[%s0 + $0x8] sm:$0xff]
  %v44 = vld [vmem:[%s0 + $0x10] sm:$0xff]
  %v45 = vld [vmem:[%s0 + $0x18] sm:$0xff]
  %v46 = vld [vmem:[%s0 + $0x20] sm:$0xff]
  %v47 = vld [vmem:[%s0 + $0x28] sm:$0xff]
  %v48 = vld [vmem:[%s0 + $0x30] sm:$0xff]
  %v49 = vld [vmem:[%s0 + $0x38] sm:$0xff]
  %v50 = vld [vmem:[%s0 + $0x40] sm:$0xff]
  %v51 = vld [vmem:[%s0 + $0x48] sm:$0xff]
  %v52 = vld [vmem:[%s0 + $0x50] sm:$0xff]
  %v53 = vld [vmem:[%s0 + $0x58] sm:$0xff]
  %v54 = vld [vmem:[%s0 + $0x60] sm:$0xff]
  %v55 = vld [vmem:[%s0 + $0x68] sm:$0xff]
  %v56 = vld [vmem:[%s0 + $0x70] sm:$0xff]
  %v57 = vld [vmem:[%s0 + $0x78] sm:$0xff]
  %v58 = vld [vmem:[%s0 + $0x80] sm:$0xff]
  %v59 = vld [vmem:[%s0 + $0x88] sm:$0xff]
  %v60 = vld [vmem:[%s0 + $0x90] sm:$0xff]
  %v61 = vld [vmem:[%s0 + $0x98] sm:$0xff]
  %v62 = vld [vmem:[%s0 + $0xa0] sm:$0xff]
  %v63 = vld [vmem:[%s0 + $0xa8] sm:$0xff]
  %v64 = vld [vmem:[%s0 + $0xb0] sm:$0xff]
  %v65 = vld [vmem:[%s0 + $0xb8] sm:$0xff]
  %v66 = vld [vmem:[%s0 + $0xc0] sm:$0xff]
  %v67 = vld [vmem:[%s0 + $0xc8] sm:$0xff]
  %v68 = vld [vmem:[%s0 + $0xd0] sm:$0xff]
  %v69 = vld [vmem:[%s0 + $0xd8] sm:$0xff]
  %v70 = vld [vmem:[%s0 + $0xe0] sm:$0xff]
  %v71 = vld [vmem:[%s0 + $0xe8] sm:$0xff]
  %v72 = vld [vmem:[%s0 + $0xf0] sm:$0xff]
  %v73 = vld [vmem:[%s0 + $0xf8] sm:$0xff]
  %v74 = vld [vmem:[%s0 + $0x100] sm:$0xff]
  %v75 = vld [vmem:[%s0 + $0x108] sm:$0xff]
  %v76 = vld [vmem:[%s0 + $0x110] sm:$0xff]
  %v77 = vld [vmem:[%s0 + $0x118] sm:$0xff]
  %v78 = vld [vmem:[%s0 + $0x120] sm:$0xff]
  %v79 = vld [vmem:[%s0 + $0x128] sm:$0xff]
  %v80 = vld [vmem:[%s0 + $0x130] sm:$0xff]
  %v81 = vld [vmem:[%s0 + $0x138] sm:$0xff]
  %v82 = vld [vmem:[%s0 + $0x140] sm:$0xff]
  %v83 = vld [vmem:[%s0 + $0x148] sm:$0xff]
  %v84 = vld [vmem:[%s0 + $0x150] sm:$0xff]
  %v85 = vld [vmem:[%s0 + $0x158] sm:$0xff]
  %v86 = vld [vmem:[%s0 + $0x160] sm:$0xff]
  %v87 = vld [vmem:[%s0 + $0x168] sm:$0xff]
  %v88 = vld [vmem:[%s0 + $0x170] sm:$0xff]
  %v89 = vld [vmem:[%s0 + $0x178] sm:$0xff]
  %v90 = vpack.c.bf16 %v44, %v42
  %v91 = vpack.c.bf16 %v45, %v43
  %v92 = vpack.c.bf16 %v48, %v46
  %v93 = vpack.c.bf16 %v49, %v47
  %v94 = vpack.c.bf16 %v52, %v50
  %v95 = vpack.c.bf16 %v53, %v51
  %v96 = vpack.c.bf16 %v56, %v54
  %v97 = vpack.c.bf16 %v57, %v55
  %v98 = vpack.c.bf16 %v60, %v58
  %v99 = vpack.c.bf16 %v61, %v59
  %v100 = vpack.c.bf16 %v64, %v62
  %v101 = vpack.c.bf16 %v65, %v63
  %v102 = vpack.c.bf16 %v68, %v66
  %v103 = vpack.c.bf16 %v69, %v67
  %v104 = vpack.c.bf16 %v72, %v70
  %v105 = vpack.c.bf16 %v73, %v71
  %v106 = vpack.c.bf16 %v76, %v74
  %v107 = vpack.c.bf16 %v77, %v75
  %v108 = vpack.c.bf16 %v80, %v78
  %v109 = vpack.c.bf16 %v81, %v79
  %v110 = vpack.c.bf16 %v84, %v82
  %v111 = vpack.c.bf16 %v85, %v83
  %v112 = vpack.c.bf16 %v88, %v86
  %v113 = vpack.c.bf16 %v89, %v87
  %v114 = vld [vmem:[%s1] sm:$0xff]
  %v115 = vld [vmem:[%s1 + $0x8] sm:$0xff]
  %v116 = vld [vmem:[%s1 + $0x10] sm:$0xff]
  %v117 = vld [vmem:[%s1 + $0x18] sm:$0xff]
  %v118 = vld [vmem:[%s1 + $0x20] sm:$0xff]
  %v119 = vld [vmem:[%s1 + $0x28] sm:$0xff]
  %v120 = vld [vmem:[%s1 + $0x30] sm:$0xff]
  %v121 = vld [vmem:[%s1 + $0x38] sm:$0xff]
  %v122 = vld [vmem:[%s1 + $0x40] sm:$0xff]
  %v123 = vld [vmem:[%s1 + $0x48] sm:$0xff]
  %v124 = vld [vmem:[%s1 + $0x50] sm:$0xff]
  %v125 = vld [vmem:[%s1 + $0x58] sm:$0xff]
  %v126 = vld [vmem:[%s1 + $0x60] sm:$0xff]
  %v127 = vld [vmem:[%s1 + $0x68] sm:$0xff]
  %v128 = vld [vmem:[%s1 + $0x70] sm:$0xff]
  %v129 = vld [vmem:[%s1 + $0x78] sm:$0xff]
  %v130 = vld [vmem:[%s1 + $0x80] sm:$0xff]
  %v131 = vld [vmem:[%s1 + $0x88] sm:$0x33]
  %v132 = vld [vmem:[%s2] sm:$0x3]
  %v134 = vlaneseq
  %v135 = vshrl.u32 %v134, 7
  %v136 = vsub.s32 0, %v135
  %v137 = vrot.slane %v132, %v136
  %v138 = vlaneseq
  %v139 = vshrl.u32 %v138, 7
  %v140 = vsub.s32 1, %v139
  %v141 = vrot.slane %v132, %v140
  %v162 = vunpack.c.l.b16 %v114
  %v163 = vunpack.c.h.b16 %v114
  %v164 = vunpack.c.l.b16 %v115
  %v165 = vunpack.c.h.b16 %v115
  %v166 = vunpack.c.l.b16 %v116
  %v167 = vunpack.c.h.b16 %v116
  %v168 = vunpack.c.l.b16 %v117
  %v169 = vunpack.c.h.b16 %v117
  %v170 = vunpack.c.l.b16 %v118
  %v171 = vunpack.c.h.b16 %v118
  %v172 = vunpack.c.l.b16 %v119
  %v173 = vunpack.c.h.b16 %v119
  %v174 = vunpack.c.l.b16 %v120
  %v175 = vunpack.c.h.b16 %v120
  %v176 = vunpack.c.l.b16 %v121
  %v177 = vunpack.c.h.b16 %v121
  %v178 = vunpack.c.l.b16 %v122
  %v179 = vunpack.c.h.b16 %v122
  %v180 = vunpack.c.l.b16 %v123
  %v181 = vunpack.c.h.b16 %v123
  %v182 = vunpack.c.l.b16 %v124
  %v183 = vunpack.c.h.b16 %v124
  %v184 = vunpack.c.l.b16 %v125
  %v185 = vunpack.c.h.b16 %v125
  %v186 = vunpack.c.l.b16 %v126
  %v187 = vunpack.c.h.b16 %v126
  %v188 = vunpack.c.l.b16 %v127
  %v189 = vunpack.c.h.b16 %v127
  %v190 = vunpack.c.l.b16 %v128
  %v191 = vunpack.c.h.b16 %v128
  %v192 = vunpack.c.l.b16 %v129
  %v193 = vunpack.c.h.b16 %v129
  %v194 = vunpack.c.l.b16 %v130
  %v195 = vunpack.c.h.b16 %v130
  %v196 = vunpack.c.l.b16 %v131
  %v197 = vunpack.c.h.b16 %v131
  %v198 = vpack.c.b16 %v164, %v162
  %v199 = vpack.c.b16 %v165, %v163
  %v200 = vpack.c.b16 %v168, %v166
  %v201 = vpack.c.b16 %v169, %v167
  %v202 = vpack.c.b16 %v172, %v170
  %v203 = vpack.c.b16 %v173, %v171
  %v204 = vpack.c.b16 %v176, %v174
  %v205 = vpack.c.b16 %v177, %v175
  %v206 = vpack.c.b16 %v180, %v178
  %v207 = vpack.c.b16 %v181, %v179
  %v208 = vpack.c.b16 %v184, %v182
  %v209 = vpack.c.b16 %v185, %v183
  %v210 = vpack.c.b16 %v188, %v186
  %v211 = vpack.c.b16 %v189, %v187
  %v212 = vpack.c.b16 %v192, %v190
  %v213 = vpack.c.b16 %v193, %v191
  %v214 = vpack.c.b16 %v196, %v194
  %v215 = vpack.c.b16 %v197, %v195
  %vm232 = vcmask 97280
  %v234 = vsel %vm232, %v91, 0
  %v237 = vsel %vm232, %v93, 0
  %v240 = vsel %vm232, %v95, 0
  %v243 = vsel %vm232, %v97, 0
  %v246 = vsel %vm232, %v99, 0
  %v249 = vsel %vm232, %v101, 0
  %v252 = vsel %vm232, %v103, 0
  %v255 = vsel %vm232, %v105, 0
  %v258 = vsel %vm232, %v107, 0
  %v261 = vsel %vm232, %v109, 0
  %v264 = vsel %vm232, %v111, 0
  %v267 = vsel %vm232, %v113, 0
  %vm269 = vcmask 1045504
  %v271 = vsel %vm269, %v214, 0
  %v274 = vsel %vm269, %v215, 0
  %276 = vmatprep.subr.bf16.mxu0 %v213
  %277 = vmatpush1.bf16.msra.mxu0 %v212
  %278 = vmatprep.subr.bf16.mxu0 %v211
  %279 = vmatpush1.bf16.msra.mxu0 %v210
  %280 = vmatprep.subr.bf16.mxu0 %v209
  %281 = vmatpush1.bf16.msra.mxu0 %v208
  %282 = vmatprep.subr.bf16.mxu0 %v207
  %283 = vmatpush1.bf16.msra.mxu0 %v206
  %284 = vmatprep.subr.bf16.mxu0 %v205
  %285 = vmatpush1.bf16.msra.mxu0 %v204
  %286 = vmatprep.subr.bf16.mxu0 %v203
  %287 = vmatpush1.bf16.msra.mxu0 %v202
  %288 = vmatprep.subr.bf16.mxu0 %v201
  %289 = vmatpush1.bf16.msra.mxu0 %v200
  %290 = vmatprep.subr.bf16.mxu0 %v199
  %291 = vmatpush1.bf16.msra.mxu0 %v198
  %292 = vmatprep.subr.bf16.mxu0 0
  %293 = vmatpush2.bf16.msra.mxu0 0
  %294 = vmatprep.subr.bf16.mxu0 0
  %295 = vmatpush2.bf16.msra.mxu0 0
  %296 = vmatprep.subr.bf16.mxu0 0
  %297 = vmatpush2.bf16.msra.mxu0 0
  %298 = vmatprep.subr.bf16.mxu0 0
  %299 = vmatpush2.bf16.msra.mxu0 0
  %300 = vmatprep.subr.bf16.mxu0 0
  %301 = vmatpush2.bf16.msra.mxu0 0
  %302 = vmatprep.subr.bf16.mxu0 0
  %303 = vmatpush2.bf16.msra.mxu0 0
  %304 = vmatprep.subr.bf16.mxu0 0
  %305 = vmatpush2.bf16.msra.mxu0 0
  %306 = vmatprep.subr.bf16.mxu0 %v274
  %307 = vmatpush2.bf16.msra.mxu0 %v271
  %308 = vmatprep.mubr.bf16.mxu0 %v234
  %309 = vmatmul.mubr.bf16.gmra.mxu0 %v90
  %v310 = vpop.f32.mrf.mxu0
  %v311 = vadd.f32 %v137, %v310
  %v312 = vpop.f32.mrf.mxu0
  %v313 = vadd.f32 %v141, %v312
  %v314 = vpop.f32.mrf.mxu0
  %v315 = vadd.f32 %v137, %v314
  %v316 = vpop.f32.mrf.mxu0
  %v317 = vadd.f32 %v141, %v316
  %318 = vmatprep.mubr.bf16.mxu0 %v237
  %319 = vmatmul.mubr.bf16.gmra.mxu0 %v92
  %v320 = vpop.f32.mrf.mxu0
  %v321 = vadd.f32 %v137, %v320
  %v322 = vpop.f32.mrf.mxu0
  %v323 = vadd.f32 %v141, %v322
  %v324 = vpop.f32.mrf.mxu0
  %v325 = vadd.f32 %v137, %v324
  %v326 = vpop.f32.mrf.mxu0
  %v327 = vadd.f32 %v141, %v326
  %328 = vmatprep.mubr.bf16.mxu0 %v240
  %329 = vmatmul.mubr.bf16.gmra.mxu0 %v94
  %v330 = vpop.f32.mrf.mxu0
  %v331 = vadd.f32 %v137, %v330
  %v332 = vpop.f32.mrf.mxu0
  %v333 = vadd.f32 %v141, %v332
  %v334 = vpop.f32.mrf.mxu0
  %v335 = vadd.f32 %v137, %v334
  %v336 = vpop.f32.mrf.mxu0
  %v337 = vadd.f32 %v141, %v336
  %338 = vmatprep.mubr.bf16.mxu0 %v243
  %339 = vmatmul.mubr.bf16.gmra.mxu0 %v96
  %v340 = vpop.f32.mrf.mxu0
  %v341 = vadd.f32 %v137, %v340
  %v342 = vpop.f32.mrf.mxu0
  %v343 = vadd.f32 %v141, %v342
  %v344 = vpop.f32.mrf.mxu0
  %v345 = vadd.f32 %v137, %v344
  %v346 = vpop.f32.mrf.mxu0
  %v347 = vadd.f32 %v141, %v346
  %348 = vmatprep.mubr.bf16.mxu0 %v246
  %349 = vmatmul.mubr.bf16.gmra.mxu0 %v98
  %v350 = vpop.f32.mrf.mxu0
  %v351 = vadd.f32 %v137, %v350
  %v352 = vpop.f32.mrf.mxu0
  %v353 = vadd.f32 %v141, %v352
  %v354 = vpop.f32.mrf.mxu0
  %v355 = vadd.f32 %v137, %v354
  %v356 = vpop.f32.mrf.mxu0
  %v357 = vadd.f32 %v141, %v356
  %358 = vmatprep.mubr.bf16.mxu0 %v249
  %359 = vmatmul.mubr.bf16.gmra.mxu0 %v100
  %v360 = vpop.f32.mrf.mxu0
  %v361 = vadd.f32 %v137, %v360
  %v362 = vpop.f32.mrf.mxu0
  %v363 = vadd.f32 %v141, %v362
  %v364 = vpop.f32.mrf.mxu0
  %v365 = vadd.f32 %v137, %v364
  %v366 = vpop.f32.mrf.mxu0
  %v367 = vadd.f32 %v141, %v366
  %368 = vmatprep.mubr.bf16.mxu0 %v252
  %369 = vmatmul.mubr.bf16.gmra.mxu0 %v102
  %v370 = vpop.f32.mrf.mxu0
  %v371 = vadd.f32 %v137, %v370
  %v372 = vpop.f32.mrf.mxu0
  %v373 = vadd.f32 %v141, %v372
  %v374 = vpop.f32.mrf.mxu0
  %v375 = vadd.f32 %v137, %v374
  %v376 = vpop.f32.mrf.mxu0
  %v377 = vadd.f32 %v141, %v376
  %378 = vmatprep.mubr.bf16.mxu0 %v255
  %379 = vmatmul.mubr.bf16.gmra.mxu0 %v104
  %v380 = vpop.f32.mrf.mxu0
  %v381 = vadd.f32 %v137, %v380
  %v382 = vpop.f32.mrf.mxu0
  %v383 = vadd.f32 %v141, %v382
  %v384 = vpop.f32.mrf.mxu0
  %v385 = vadd.f32 %v137, %v384
  %v386 = vpop.f32.mrf.mxu0
  %v387 = vadd.f32 %v141, %v386
  %388 = vmatprep.mubr.bf16.mxu0 %v258
  %389 = vmatmul.mubr.bf16.gmra.mxu0 %v106
  %v390 = vpop.f32.mrf.mxu0
  %v391 = vadd.f32 %v137, %v390
  %v392 = vpop.f32.mrf.mxu0
  %v393 = vadd.f32 %v141, %v392
  %v394 = vpop.f32.mrf.mxu0
  %v395 = vadd.f32 %v137, %v394
  %v396 = vpop.f32.mrf.mxu0
  %v397 = vadd.f32 %v141, %v396
  %398 = vmatprep.mubr.bf16.mxu0 %v261
  %399 = vmatmul.mubr.bf16.gmra.mxu0 %v108
  %v400 = vpop.f32.mrf.mxu0
  %v401 = vadd.f32 %v137, %v400
  %v402 = vpop.f32.mrf.mxu0
  %v403 = vadd.f32 %v141, %v402
  %v404 = vpop.f32.mrf.mxu0
  %v405 = vadd.f32 %v137, %v404
  %v406 = vpop.f32.mrf.mxu0
  %v407 = vadd.f32 %v141, %v406
  %408 = vmatprep.mubr.bf16.mxu0 %v264
  %409 = vmatmul.mubr.bf16.gmra.mxu0 %v110
  %v410 = vpop.f32.mrf.mxu0
  %v411 = vadd.f32 %v137, %v410
  %v412 = vpop.f32.mrf.mxu0
  %v413 = vadd.f32 %v141, %v412
  %v414 = vpop.f32.mrf.mxu0
  %v415 = vadd.f32 %v137, %v414
  %v416 = vpop.f32.mrf.mxu0
  %v417 = vadd.f32 %v141, %v416
  %418 = vmatprep.mubr.bf16.mxu0 %v267
  %419 = vmatmul.mubr.bf16.gmra.mxu0 %v112
  %v420 = vpop.f32.mrf.mxu0
  %v421 = vadd.f32 %v137, %v420
  %v422 = vpop.f32.mrf.mxu0
  %v423 = vadd.f32 %v141, %v422
  %v424 = vpop.f32.mrf.mxu0
  %v425 = vadd.f32 %v137, %v424
  %v426 = vpop.f32.mrf.mxu0
  %v427 = vadd.f32 %v141, %v426
  %428 = vdwg.mxu0
  %v429 = vtanh.pop %v311
  %v430 = vtanh.pop %v313
  %v431 = vtanh.pop %v315
  %v432 = vtanh.pop %v317
  %v433 = vtanh.pop %v321
  %v434 = vtanh.pop %v323
  %v435 = vtanh.pop %v325
  %v436 = vtanh.pop %v327
  %v437 = vtanh.pop %v331
  %v438 = vtanh.pop %v333
  %v439 = vtanh.pop %v335
  %v440 = vtanh.pop %v337
  %v441 = vtanh.pop %v341
  %v442 = vtanh.pop %v343
  %v443 = vtanh.pop %v345
  %v444 = vtanh.pop %v347
  %v445 = vtanh.pop %v351
  %v446 = vtanh.pop %v353
  %v447 = vtanh.pop %v355
  %v448 = vtanh.pop %v357
  %v449 = vtanh.pop %v361
  %v450 = vtanh.pop %v363
  %v451 = vtanh.pop %v365
  %v452 = vtanh.pop %v367
  %v453 = vtanh.pop %v371
  %v454 = vtanh.pop %v373
  %v455 = vtanh.pop %v375
  %v456 = vtanh.pop %v377
  %v457 = vtanh.pop %v381
  %v458 = vtanh.pop %v383
  %v459 = vtanh.pop %v385
  %v460 = vtanh.pop %v387
  %v461 = vtanh.pop %v391
  %v462 = vtanh.pop %v393
  %v463 = vtanh.pop %v395
  %v464 = vtanh.pop %v397
  %v465 = vtanh.pop %v401
  %v466 = vtanh.pop %v403
  %v467 = vtanh.pop %v405
  %v468 = vtanh.pop %v407
  %v469 = vtanh.pop %v411
  %v470 = vtanh.pop %v413
  %v471 = vtanh.pop %v415
  %v472 = vtanh.pop %v417
  %v473 = vtanh.pop %v421
  %v474 = vtanh.pop %v423
  %v475 = vtanh.pop %v425
  %v476 = vtanh.pop %v427
  %v477 = vadd.f32 %v429, %v431
  %v478 = vadd.f32 %v430, %v432
  %v479 = vadd.f32 %v433, %v435
  %v480 = vadd.f32 %v434, %v436
  %v481 = vadd.f32 %v437, %v439
  %v482 = vadd.f32 %v438, %v440
  %v483 = vadd.f32 %v441, %v443
  %v484 = vadd.f32 %v442, %v444
  %v485 = vadd.f32 %v445, %v447
  %v486 = vadd.f32 %v446, %v448
  %v487 = vadd.f32 %v449, %v451
  %v488 = vadd.f32 %v450, %v452
  %v489 = vadd.f32 %v453, %v455
  %v490 = vadd.f32 %v454, %v456
  %v491 = vadd.f32 %v457, %v459
  %v492 = vadd.f32 %v458, %v460
  %v493 = vadd.f32 %v461, %v463
  %v494 = vadd.f32 %v462, %v464
  %v495 = vadd.f32 %v465, %v467
  %v496 = vadd.f32 %v466, %v468
  %v497 = vadd.f32 %v469, %v471
  %v498 = vadd.f32 %v470, %v472
  %v499 = vadd.f32 %v473, %v475
  %v500 = vadd.f32 %v474, %v476
  %v501 = vmul.f32 %v477, 0.5
  %v502 = vmul.f32 %v478, 0.5
  %v503 = vmul.f32 %v479, 0.5
  %v504 = vmul.f32 %v480, 0.5
  %v505 = vmul.f32 %v481, 0.5
  %v506 = vmul.f32 %v482, 0.5
  %v507 = vmul.f32 %v483, 0.5
  %v508 = vmul.f32 %v484, 0.5
  %v509 = vmul.f32 %v485, 0.5
  %v510 = vmul.f32 %v486, 0.5
  %v511 = vmul.f32 %v487, 0.5
  %v512 = vmul.f32 %v488, 0.5
  %v513 = vmul.f32 %v489, 0.5
  %v514 = vmul.f32 %v490, 0.5
  %v515 = vmul.f32 %v491, 0.5
  %v516 = vmul.f32 %v492, 0.5
  %v517 = vmul.f32 %v493, 0.5
  %v518 = vmul.f32 %v494, 0.5
  %v519 = vmul.f32 %v495, 0.5
  %v520 = vmul.f32 %v496, 0.5
  %v521 = vmul.f32 %v497, 0.5
  %v522 = vmul.f32 %v498, 0.5
  %v523 = vmul.f32 %v499, 0.5
  %v524 = vmul.f32 %v500, 0.5
  %v525 = vpack.c.bf16 %v503, %v501
  %v526 = vpack.c.bf16 %v504, %v502
  %v527 = vpack.c.bf16 %v507, %v505
  %v528 = vpack.c.bf16 %v508, %v506
  %v529 = vpack.c.bf16 %v511, %v509
  %v530 = vpack.c.bf16 %v512, %v510
  %v531 = vpack.c.bf16 %v515, %v513
  %v532 = vpack.c.bf16 %v516, %v514
  %v533 = vld [vmem:[%s3] sm:$0xf]
  %v534 = vld [vmem:[%s3 + $0x4] sm:$0xf]
  %v535 = vld [vmem:[%s3 + $0x8] sm:$0xf]
  %v536 = vld [vmem:[%s3 + $0xc] sm:$0xf]
  %v537 = vld [vmem:[%s3 + $0x10] sm:$0xf]
  %v538 = vld [vmem:[%s3 + $0x14] sm:$0xf]
  %v539 = vld [vmem:[%s3 + $0x18] sm:$0xf]
  %v540 = vld [vmem:[%s3 + $0x1c] sm:$0xf]
  %v541 = vld [vmem:[%s3 + $0x20] sm:$0xf]
  %v542 = vld [vmem:[%s3 + $0x24] sm:$0xf]
  %v543 = vld [vmem:[%s3 + $0x28] sm:$0xf]
  %v544 = vld [vmem:[%s3 + $0x2c] sm:$0xf]
  %v545 = vld [vmem:[%s3 + $0x30] sm:$0xf]
  %v546 = vld [vmem:[%s3 + $0x34] sm:$0xf]
  %v547 = vld [vmem:[%s3 + $0x38] sm:$0xf]
  %v548 = vld [vmem:[%s3 + $0x3c] sm:$0xf]
  %v549 = vld [vmem:[%s3 + $0x40] sm:$0xf]
  %v550 = vld [vmem:[%s3 + $0x44] sm:$0xf]
  %v551 = vpack.c.bf16 %v505, %v503
  %v552 = vpack.c.bf16 %v506, %v504
  %v553 = vpack.c.bf16 %v509, %v507
  %v554 = vpack.c.bf16 %v510, %v508
  %v555 = vpack.c.bf16 %v513, %v511
  %v556 = vpack.c.bf16 %v514, %v512
  %v557 = vpack.c.bf16 %v517, %v515
  %v558 = vpack.c.bf16 %v518, %v516
  %s559 = scalar_lea.vmem %s3, 72
  %v560 = vld [vmem:[%s559] sm:$0xf]
  %v561 = vld [vmem:[%s559 + $0x4] sm:$0xf]
  %v562 = vld [vmem:[%s559 + $0x8] sm:$0xf]
  %v563 = vld [vmem:[%s559 + $0xc] sm:$0xf]
  %v564 = vld [vmem:[%s559 + $0x10] sm:$0xf]
  %v565 = vld [vmem:[%s559 + $0x14] sm:$0xf]
  %v566 = vld [vmem:[%s559 + $0x18] sm:$0xf]
  %v567 = vld [vmem:[%s559 + $0x1c] sm:$0xf]
  %v568 = vld [vmem:[%s559 + $0x20] sm:$0xf]
  %v569 = vld [vmem:[%s559 + $0x24] sm:$0xf]
  %v570 = vld [vmem:[%s559 + $0x28] sm:$0xf]
  %v571 = vld [vmem:[%s559 + $0x2c] sm:$0xf]
  %v572 = vld [vmem:[%s559 + $0x30] sm:$0xf]
  %v573 = vld [vmem:[%s559 + $0x34] sm:$0xf]
  %v574 = vld [vmem:[%s559 + $0x38] sm:$0xf]
  %v575 = vld [vmem:[%s559 + $0x3c] sm:$0xf]
  %v576 = vld [vmem:[%s559 + $0x40] sm:$0xf]
  %v577 = vld [vmem:[%s559 + $0x44] sm:$0xf]
  %v596 = vunpack.c.l.b16 %v560
  %v597 = vunpack.c.l.b16 %v561
  %v598 = vunpack.c.l.b16 %v562
  %v599 = vunpack.c.l.b16 %v563
  %v600 = vunpack.c.l.b16 %v564
  %v601 = vunpack.c.l.b16 %v565
  %v602 = vunpack.c.l.b16 %v566
  %v603 = vunpack.c.l.b16 %v567
  %v604 = vunpack.c.l.b16 %v568
  %v605 = vunpack.c.l.b16 %v569
  %v606 = vunpack.c.l.b16 %v570
  %v607 = vunpack.c.l.b16 %v571
  %v608 = vunpack.c.l.b16 %v572
  %v609 = vunpack.c.l.b16 %v573
  %v610 = vunpack.c.l.b16 %v574
  %v611 = vunpack.c.l.b16 %v575
  %v612 = vunpack.c.l.b16 %v576
  %v613 = vunpack.c.l.b16 %v577
  %v614 = vpack.c.b16 %v597, %v596
  %v615 = vpack.c.b16 %v599, %v598
  %v616 = vpack.c.b16 %v601, %v600
  %v617 = vpack.c.b16 %v603, %v602
  %v618 = vpack.c.b16 %v605, %v604
  %v619 = vpack.c.b16 %v607, %v606
  %v620 = vpack.c.b16 %v609, %v608
  %v621 = vpack.c.b16 %v611, %v610
  %v622 = vpack.c.b16 %v613, %v612
  %vm632 = vcmask 130048
  %v634 = vsel %vm632, %v552, 0
  %v637 = vsel %vm632, %v554, 0
  %v640 = vsel %vm632, %v556, 0
  %v643 = vsel %vm632, %v558, 0
  %645 = vmatprep.subr.bf16.mxu0 0
  %646 = vmatpush1.bf16.msra.mxu0 %v621
  %647 = vmatprep.subr.bf16.mxu0 0
  %648 = vmatpush1.bf16.msra.mxu0 %v620
  %649 = vmatprep.subr.bf16.mxu0 0
  %650 = vmatpush1.bf16.msra.mxu0 %v619
  %651 = vmatprep.subr.bf16.mxu0 0
  %652 = vmatpush1.bf16.msra.mxu0 %v618
  %653 = vmatprep.subr.bf16.mxu0 0
  %654 = vmatpush1.bf16.msra.mxu0 %v617
  %655 = vmatprep.subr.bf16.mxu0 0
  %656 = vmatpush1.bf16.msra.mxu0 %v616
  %657 = vmatprep.subr.bf16.mxu0 0
  %658 = vmatpush1.bf16.msra.mxu0 %v615
  %659 = vmatprep.subr.bf16.mxu0 0
  %660 = vmatpush1.bf16.msra.mxu0 %v614
  %661 = vmatprep.subr.bf16.mxu0 0
  %662 = vmatpush2.bf16.msra.mxu0 0
  %663 = vmatprep.subr.bf16.mxu0 0
  %664 = vmatpush2.bf16.msra.mxu0 0
  %665 = vmatprep.subr.bf16.mxu0 0
  %666 = vmatpush2.bf16.msra.mxu0 0
  %667 = vmatprep.subr.bf16.mxu0 0
  %668 = vmatpush2.bf16.msra.mxu0 0
  %669 = vmatprep.subr.bf16.mxu0 0
  %670 = vmatpush2.bf16.msra.mxu0 0
  %671 = vmatprep.subr.bf16.mxu0 0
  %672 = vmatpush2.bf16.msra.mxu0 0
  %673 = vmatprep.subr.bf16.mxu0 0
  %674 = vmatpush2.bf16.msra.mxu0 0
  %675 = vmatprep.subr.bf16.mxu0 0
  %676 = vmatpush2.bf16.msra.mxu0 %v622
  %677 = vmatprep.mubr.bf16.mxu0 %v634
  %678 = vmatmul.mubr.bf16.gmra.mxu0 %v551
  %v679 = vpop.f32.mrf.mxu0
  %v680 = vadd.f32 0.0, %v679
  %v681 = vpop.f32.mrf.mxu0
  %v682 = vpop.f32.mrf.mxu0
  %v683 = vadd.f32 0.0, %v682
  %v684 = vpop.f32.mrf.mxu0
  %685 = vmatprep.mubr.bf16.mxu0 %v637
  %686 = vmatmul.mubr.bf16.gmra.mxu0 %v553
  %v687 = vpop.f32.mrf.mxu0
  %v688 = vadd.f32 0.0, %v687
  %v689 = vpop.f32.mrf.mxu0
  %v690 = vpop.f32.mrf.mxu0
  %v691 = vadd.f32 0.0, %v690
  %v692 = vpop.f32.mrf.mxu0
  %693 = vmatprep.mubr.bf16.mxu0 %v640
  %694 = vmatmul.mubr.bf16.gmra.mxu0 %v555
  %v695 = vpop.f32.mrf.mxu0
  %v696 = vadd.f32 0.0, %v695
  %v697 = vpop.f32.mrf.mxu0
  %v698 = vpop.f32.mrf.mxu0
  %v699 = vadd.f32 0.0, %v698
  %v700 = vpop.f32.mrf.mxu0
  %701 = vmatprep.mubr.bf16.mxu0 %v643
  %702 = vmatmul.mubr.bf16.gmra.mxu0 %v557
  %v703 = vpop.f32.mrf.mxu0
  %v704 = vadd.f32 0.0, %v703
  %v705 = vpop.f32.mrf.mxu0
  %v706 = vpop.f32.mrf.mxu0
  %v707 = vadd.f32 0.0, %v706
  %v708 = vpop.f32.mrf.mxu0
  %709 = vdwg.mxu0
  %v728 = vunpack.c.l.b16 %v533
  %v729 = vunpack.c.l.b16 %v534
  %v730 = vunpack.c.l.b16 %v535
  %v731 = vunpack.c.l.b16 %v536
  %v732 = vunpack.c.l.b16 %v537
  %v733 = vunpack.c.l.b16 %v538
  %v734 = vunpack.c.l.b16 %v539
  %v735 = vunpack.c.l.b16 %v540
  %v736 = vunpack.c.l.b16 %v541
  %v737 = vunpack.c.l.b16 %v542
  %v738 = vunpack.c.l.b16 %v543
  %v739 = vunpack.c.l.b16 %v544
  %v740 = vunpack.c.l.b16 %v545
  %v741 = vunpack.c.l.b16 %v546
  %v742 = vunpack.c.l.b16 %v547
  %v743 = vunpack.c.l.b16 %v548
  %v744 = vunpack.c.l.b16 %v549
  %v745 = vunpack.c.l.b16 %v550
  %v746 = vpack.c.b16 %v729, %v728
  %v747 = vpack.c.b16 %v731, %v730
  %v748 = vpack.c.b16 %v733, %v732
  %v749 = vpack.c.b16 %v735, %v734
  %v750 = vpack.c.b16 %v737, %v736
  %v751 = vpack.c.b16 %v739, %v738
  %v752 = vpack.c.b16 %v741, %v740
  %v753 = vpack.c.b16 %v743, %v742
  %v754 = vpack.c.b16 %v745, %v744
  %v765 = vsel %vm632, %v526, 0
  %v768 = vsel %vm632, %v528, 0
  %v771 = vsel %vm632, %v530, 0
  %v774 = vsel %vm632, %v532, 0
  %776 = vmatprep.subr.bf16.mxu0 0
  %777 = vmatpush1.bf16.msra.mxu0 %v753
  %778 = vmatprep.subr.bf16.mxu0 0
  %779 = vmatpush1.bf16.msra.mxu0 %v752
  %780 = vmatprep.subr.bf16.mxu0 0
  %781 = vmatpush1.bf16.msra.mxu0 %v751
  %782 = vmatprep.subr.bf16.mxu0 0
  %783 = vmatpush1.bf16.msra.mxu0 %v750
  %784 = vmatprep.subr.bf16.mxu0 0
  %785 = vmatpush1.bf16.msra.mxu0 %v749
  %786 = vmatprep.subr.bf16.mxu0 0
  %787 = vmatpush1.bf16.msra.mxu0 %v748
  %788 = vmatprep.subr.bf16.mxu0 0
  %789 = vmatpush1.bf16.msra.mxu0 %v747
  %790 = vmatprep.subr.bf16.mxu0 0
  %791 = vmatpush1.bf16.msra.mxu0 %v746
  %792 = vmatprep.subr.bf16.mxu0 0
  %793 = vmatpush2.bf16.msra.mxu0 0
  %794 = vmatprep.subr.bf16.mxu0 0
  %795 = vmatpush2.bf16.msra.mxu0 0
  %796 = vmatprep.subr.bf16.mxu0 0
  %797 = vmatpush2.bf16.msra.mxu0 0
  %798 = vmatprep.subr.bf16.mxu0 0
  %799 = vmatpush2.bf16.msra.mxu0 0
  %800 = vmatprep.subr.bf16.mxu0 0
  %801 = vmatpush2.bf16.msra.mxu0 0
  %802 = vmatprep.subr.bf16.mxu0 0
  %803 = vmatpush2.bf16.msra.mxu0 0
  %804 = vmatprep.subr.bf16.mxu0 0
  %805 = vmatpush2.bf16.msra.mxu0 0
  %806 = vmatprep.subr.bf16.mxu0 0
  %807 = vmatpush2.bf16.msra.mxu0 %v754
  %808 = vmatprep.mubr.bf16.mxu0 %v765
  %809 = vmatmul.mubr.bf16.gmra.mxu0 %v525
  %v810 = vpop.f32.mrf.mxu0
  %v811 = vadd.f32 %v680, %v810
  %v812 = vpop.f32.mrf.mxu0
  %v813 = vpop.f32.mrf.mxu0
  %v814 = vadd.f32 %v683, %v813
  %v815 = vpop.f32.mrf.mxu0
  %816 = vmatprep.mubr.bf16.mxu0 %v768
  %817 = vmatmul.mubr.bf16.gmra.mxu0 %v527
  %v818 = vpop.f32.mrf.mxu0
  %v819 = vadd.f32 %v688, %v818
  %v820 = vpop.f32.mrf.mxu0
  %v821 = vpop.f32.mrf.mxu0
  %v822 = vadd.f32 %v691, %v821
  %v823 = vpop.f32.mrf.mxu0
  %824 = vmatprep.mubr.bf16.mxu0 %v771
  %825 = vmatmul.mubr.bf16.gmra.mxu0 %v529
  %v826 = vpop.f32.mrf.mxu0
  %v827 = vadd.f32 %v696, %v826
  %v828 = vpop.f32.mrf.mxu0
  %v829 = vpop.f32.mrf.mxu0
  %v830 = vadd.f32 %v699, %v829
  %v831 = vpop.f32.mrf.mxu0
  %832 = vmatprep.mubr.bf16.mxu0 %v774
  %833 = vmatmul.mubr.bf16.gmra.mxu0 %v531
  %v834 = vpop.f32.mrf.mxu0
  %v835 = vadd.f32 %v704, %v834
  %v836 = vpop.f32.mrf.mxu0
  %v837 = vpop.f32.mrf.mxu0
  %v838 = vadd.f32 %v707, %v837
  %v839 = vpop.f32.mrf.mxu0
  %840 = vdwg.mxu0
  %v841 = vpack.c.bf16 %v519, %v517
  %v842 = vpack.c.bf16 %v520, %v518
  %s843 = scalar_lea.vmem %s3, 144
  %v844 = vld [vmem:[%s843] sm:$0xf]
  %v845 = vld [vmem:[%s843 + $0x4] sm:$0xf]
  %v846 = vld [vmem:[%s843 + $0x8] sm:$0xf]
  %v847 = vld [vmem:[%s843 + $0xc] sm:$0xf]
  %v848 = vld [vmem:[%s843 + $0x10] sm:$0xf]
  %v849 = vld [vmem:[%s843 + $0x14] sm:$0xf]
  %v850 = vld [vmem:[%s843 + $0x18] sm:$0xf]
  %v851 = vld [vmem:[%s843 + $0x1c] sm:$0xf]
  %v852 = vld [vmem:[%s843 + $0x20] sm:$0xf]
  %v853 = vld [vmem:[%s843 + $0x24] sm:$0xf]
  %v854 = vld [vmem:[%s843 + $0x28] sm:$0xf]
  %v855 = vld [vmem:[%s843 + $0x2c] sm:$0xf]
  %v856 = vld [vmem:[%s843 + $0x30] sm:$0xf]
  %v857 = vld [vmem:[%s843 + $0x34] sm:$0xf]
  %v858 = vld [vmem:[%s843 + $0x38] sm:$0xf]
  %v859 = vld [vmem:[%s843 + $0x3c] sm:$0xf]
  %v860 = vld [vmem:[%s843 + $0x40] sm:$0xf]
  %v861 = vld [vmem:[%s843 + $0x44] sm:$0xf]
  %v880 = vunpack.c.l.b16 %v844
  %v881 = vunpack.c.l.b16 %v845
  %v882 = vunpack.c.l.b16 %v846
  %v883 = vunpack.c.l.b16 %v847
  %v884 = vunpack.c.l.b16 %v848
  %v885 = vunpack.c.l.b16 %v849
  %v886 = vunpack.c.l.b16 %v850
  %v887 = vunpack.c.l.b16 %v851
  %v888 = vunpack.c.l.b16 %v852
  %v889 = vunpack.c.l.b16 %v853
  %v890 = vunpack.c.l.b16 %v854
  %v891 = vunpack.c.l.b16 %v855
  %v892 = vunpack.c.l.b16 %v856
  %v893 = vunpack.c.l.b16 %v857
  %v894 = vunpack.c.l.b16 %v858
  %v895 = vunpack.c.l.b16 %v859
  %v896 = vunpack.c.l.b16 %v860
  %v897 = vunpack.c.l.b16 %v861
  %v898 = vpack.c.b16 %v881, %v880
  %v899 = vpack.c.b16 %v883, %v882
  %v900 = vpack.c.b16 %v885, %v884
  %v901 = vpack.c.b16 %v887, %v886
  %v902 = vpack.c.b16 %v889, %v888
  %v903 = vpack.c.b16 %v891, %v890
  %v904 = vpack.c.b16 %v893, %v892
  %v905 = vpack.c.b16 %v895, %v894
  %v906 = vpack.c.b16 %v897, %v896
  %v917 = vsel %vm632, %v842, 0
  %919 = vmatprep.subr.bf16.mxu0 0
  %920 = vmatpush1.bf16.msra.mxu0 %v905
  %921 = vmatprep.subr.bf16.mxu0 0
  %922 = vmatpush1.bf16.msra.mxu0 %v904
  %923 = vmatprep.subr.bf16.mxu0 0
  %924 = vmatpush1.bf16.msra.mxu0 %v903
  %925 = vmatprep.subr.bf16.mxu0 0
  %926 = vmatpush1.bf16.msra.mxu0 %v902
  %927 = vmatprep.subr.bf16.mxu0 0
  %928 = vmatpush1.bf16.msra.mxu0 %v901
  %929 = vmatprep.subr.bf16.mxu0 0
  %930 = vmatpush1.bf16.msra.mxu0 %v900
  %931 = vmatprep.subr.bf16.mxu0 0
  %932 = vmatpush1.bf16.msra.mxu0 %v899
  %933 = vmatprep.subr.bf16.mxu0 0
  %934 = vmatpush1.bf16.msra.mxu0 %v898
  %935 = vmatprep.subr.bf16.mxu0 0
  %936 = vmatpush2.bf16.msra.mxu0 0
  %937 = vmatprep.subr.bf16.mxu0 0
  %938 = vmatpush2.bf16.msra.mxu0 0
  %939 = vmatprep.subr.bf16.mxu0 0
  %940 = vmatpush2.bf16.msra.mxu0 0
  %941 = vmatprep.subr.bf16.mxu0 0
  %942 = vmatpush2.bf16.msra.mxu0 0
  %943 = vmatprep.subr.bf16.mxu0 0
  %944 = vmatpush2.bf16.msra.mxu0 0
  %945 = vmatprep.subr.bf16.mxu0 0
  %946 = vmatpush2.bf16.msra.mxu0 0
  %947 = vmatprep.subr.bf16.mxu0 0
  %948 = vmatpush2.bf16.msra.mxu0 0
  %949 = vmatprep.subr.bf16.mxu0 0
  %950 = vmatpush2.bf16.msra.mxu0 %v906
  %951 = vmatprep.mubr.bf16.mxu0 %v768
  %952 = vmatmul.mubr.bf16.gmra.mxu0 %v527
  %v953 = vpop.f32.mrf.mxu0
  %v954 = vadd.f32 0.0, %v953
  %v955 = vpop.f32.mrf.mxu0
  %v956 = vpop.f32.mrf.mxu0
  %v957 = vadd.f32 0.0, %v956
  %v958 = vpop.f32.mrf.mxu0
  %959 = vmatprep.mubr.bf16.mxu0 %v771
  %960 = vmatmul.mubr.bf16.gmra.mxu0 %v529
  %v961 = vpop.f32.mrf.mxu0
  %v962 = vadd.f32 0.0, %v961
  %v963 = vpop.f32.mrf.mxu0
  %v964 = vpop.f32.mrf.mxu0
  %v965 = vadd.f32 0.0, %v964
  %v966 = vpop.f32.mrf.mxu0
  %967 = vmatprep.mubr.bf16.mxu0 %v774
  %968 = vmatmul.mubr.bf16.gmra.mxu0 %v531
  %v969 = vpop.f32.mrf.mxu0
  %v970 = vadd.f32 0.0, %v969
  %v971 = vpop.f32.mrf.mxu0
  %v972 = vpop.f32.mrf.mxu0
  %v973 = vadd.f32 0.0, %v972
  %v974 = vpop.f32.mrf.mxu0
  %975 = vmatprep.mubr.bf16.mxu0 %v917
  %976 = vmatmul.mubr.bf16.gmra.mxu0 %v841
  %v977 = vpop.f32.mrf.mxu0
  %v978 = vadd.f32 0.0, %v977
  %v979 = vpop.f32.mrf.mxu0
  %v980 = vpop.f32.mrf.mxu0
  %v981 = vadd.f32 0.0, %v980
  %v982 = vpop.f32.mrf.mxu0
  %983 = vdwg.mxu0
  %v984 = vadd.f32 %v811, %v954
  %v985 = vadd.f32 %v814, %v957
  %v986 = vadd.f32 %v819, %v962
  %v987 = vadd.f32 %v822, %v965
  %v988 = vadd.f32 %v827, %v970
  %v989 = vadd.f32 %v830, %v973
  %v990 = vadd.f32 %v835, %v978
  %v991 = vadd.f32 %v838, %v981
  %v992 = vpack.c.bf16 %v521, %v519
  %v993 = vpack.c.bf16 %v522, %v520
  %s994 = scalar_lea.vmem %s3, 216
  %v995 = vld [vmem:[%s994] sm:$0xf]
  %v996 = vld [vmem:[%s994 + $0x4] sm:$0xf]
  %v997 = vld [vmem:[%s994 + $0x8] sm:$0xf]
  %v998 = vld [vmem:[%s994 + $0xc] sm:$0xf]
  %v999 = vld [vmem:[%s994 + $0x10] sm:$0xf]
  %v1000 = vld [vmem:[%s994 + $0x14] sm:$0xf]
  %v1001 = vld [vmem:[%s994 + $0x18] sm:$0xf]
  %v1002 = vld [vmem:[%s994 + $0x1c] sm:$0xf]
  %v1003 = vld [vmem:[%s994 + $0x20] sm:$0xf]
  %v1004 = vld [vmem:[%s994 + $0x24] sm:$0xf]
  %v1005 = vld [vmem:[%s994 + $0x28] sm:$0xf]
  %v1006 = vld [vmem:[%s994 + $0x2c] sm:$0xf]
  %v1007 = vld [vmem:[%s994 + $0x30] sm:$0xf]
  %v1008 = vld [vmem:[%s994 + $0x34] sm:$0xf]
  %v1009 = vld [vmem:[%s994 + $0x38] sm:$0xf]
  %v1010 = vld [vmem:[%s994 + $0x3c] sm:$0xf]
  %v1011 = vld [vmem:[%s994 + $0x40] sm:$0xf]
  %v1012 = vld [vmem:[%s994 + $0x44] sm:$0xf]
  %v1031 = vunpack.c.l.b16 %v995
  %v1032 = vunpack.c.l.b16 %v996
  %v1033 = vunpack.c.l.b16 %v997
  %v1034 = vunpack.c.l.b16 %v998
  %v1035 = vunpack.c.l.b16 %v999
  %v1036 = vunpack.c.l.b16 %v1000
  %v1037 = vunpack.c.l.b16 %v1001
  %v1038 = vunpack.c.l.b16 %v1002
  %v1039 = vunpack.c.l.b16 %v1003
  %v1040 = vunpack.c.l.b16 %v1004
  %v1041 = vunpack.c.l.b16 %v1005
  %v1042 = vunpack.c.l.b16 %v1006
  %v1043 = vunpack.c.l.b16 %v1007
  %v1044 = vunpack.c.l.b16 %v1008
  %v1045 = vunpack.c.l.b16 %v1009
  %v1046 = vunpack.c.l.b16 %v1010
  %v1047 = vunpack.c.l.b16 %v1011
  %v1048 = vunpack.c.l.b16 %v1012
  %v1049 = vpack.c.b16 %v1032, %v1031
  %v1050 = vpack.c.b16 %v1034, %v1033
  %v1051 = vpack.c.b16 %v1036, %v1035
  %v1052 = vpack.c.b16 %v1038, %v1037
  %v1053 = vpack.c.b16 %v1040, %v1039
  %v1054 = vpack.c.b16 %v1042, %v1041
  %v1055 = vpack.c.b16 %v1044, %v1043
  %v1056 = vpack.c.b16 %v1046, %v1045
  %v1057 = vpack.c.b16 %v1048, %v1047
  %v1068 = vsel %vm632, %v993, 0
  %1070 = vmatprep.subr.bf16.mxu0 0
  %1071 = vmatpush1.bf16.msra.mxu0 %v1056
  %1072 = vmatprep.subr.bf16.mxu0 0
  %1073 = vmatpush1.bf16.msra.mxu0 %v1055
  %1074 = vmatprep.subr.bf16.mxu0 0
  %1075 = vmatpush1.bf16.msra.mxu0 %v1054
  %1076 = vmatprep.subr.bf16.mxu0 0
  %1077 = vmatpush1.bf16.msra.mxu0 %v1053
  %1078 = vmatprep.subr.bf16.mxu0 0
  %1079 = vmatpush1.bf16.msra.mxu0 %v1052
  %1080 = vmatprep.subr.bf16.mxu0 0
  %1081 = vmatpush1.bf16.msra.mxu0 %v1051
  %1082 = vmatprep.subr.bf16.mxu0 0
  %1083 = vmatpush1.bf16.msra.mxu0 %v1050
  %1084 = vmatprep.subr.bf16.mxu0 0
  %1085 = vmatpush1.bf16.msra.mxu0 %v1049
  %1086 = vmatprep.subr.bf16.mxu0 0
  %1087 = vmatpush2.bf16.msra.mxu0 0
  %1088 = vmatprep.subr.bf16.mxu0 0
  %1089 = vmatpush2.bf16.msra.mxu0 0
  %1090 = vmatprep.subr.bf16.mxu0 0
  %1091 = vmatpush2.bf16.msra.mxu0 0
  %1092 = vmatprep.subr.bf16.mxu0 0
  %1093 = vmatpush2.bf16.msra.mxu0 0
  %1094 = vmatprep.subr.bf16.mxu0 0
  %1095 = vmatpush2.bf16.msra.mxu0 0
  %1096 = vmatprep.subr.bf16.mxu0 0
  %1097 = vmatpush2.bf16.msra.mxu0 0
  %1098 = vmatprep.subr.bf16.mxu0 0
  %1099 = vmatpush2.bf16.msra.mxu0 0
  %1100 = vmatprep.subr.bf16.mxu0 0
  %1101 = vmatpush2.bf16.msra.mxu0 %v1057
  %1102 = vmatprep.mubr.bf16.mxu0 %v637
  %1103 = vmatmul.mubr.bf16.gmra.mxu0 %v553
  %v1104 = vpop.f32.mrf.mxu0
  %v1105 = vadd.f32 0.0, %v1104
  %v1106 = vpop.f32.mrf.mxu0
  %v1107 = vpop.f32.mrf.mxu0
  %v1108 = vadd.f32 0.0, %v1107
  %v1109 = vpop.f32.mrf.mxu0
  %1110 = vmatprep.mubr.bf16.mxu0 %v640
  %1111 = vmatmul.mubr.bf16.gmra.mxu0 %v555
  %v1112 = vpop.f32.mrf.mxu0
  %v1113 = vadd.f32 0.0, %v1112
  %v1114 = vpop.f32.mrf.mxu0
  %v1115 = vpop.f32.mrf.mxu0
  %v1116 = vadd.f32 0.0, %v1115
  %v1117 = vpop.f32.mrf.mxu0
  %1118 = vmatprep.mubr.bf16.mxu0 %v643
  %1119 = vmatmul.mubr.bf16.gmra.mxu0 %v557
  %v1120 = vpop.f32.mrf.mxu0
  %v1121 = vadd.f32 0.0, %v1120
  %v1122 = vpop.f32.mrf.mxu0
  %v1123 = vpop.f32.mrf.mxu0
  %v1124 = vadd.f32 0.0, %v1123
  %v1125 = vpop.f32.mrf.mxu0
  %1126 = vmatprep.mubr.bf16.mxu0 %v1068
  %1127 = vmatmul.mubr.bf16.gmra.mxu0 %v992
  %v1128 = vpop.f32.mrf.mxu0
  %v1129 = vadd.f32 0.0, %v1128
  %v1130 = vpop.f32.mrf.mxu0
  %v1131 = vpop.f32.mrf.mxu0
  %v1132 = vadd.f32 0.0, %v1131
  %v1133 = vpop.f32.mrf.mxu0
  %1134 = vdwg.mxu0
  %v1135 = vadd.f32 %v984, %v1105
  %v1136 = vadd.f32 %v985, %v1108
  %v1137 = vadd.f32 %v986, %v1113
  %v1138 = vadd.f32 %v987, %v1116
  %v1139 = vadd.f32 %v988, %v1121
  %v1140 = vadd.f32 %v989, %v1124
  %v1141 = vadd.f32 %v990, %v1129
  %v1142 = vadd.f32 %v991, %v1132
  %v1143 = vpack.c.bf16 %v523, %v521
  %v1144 = vpack.c.bf16 %v524, %v522
  %s1145 = scalar_lea.vmem %s3, 288
  %v1146 = vld [vmem:[%s1145] sm:$0xf]
  %v1147 = vld [vmem:[%s1145 + $0x4] sm:$0xf]
  %v1148 = vld [vmem:[%s1145 + $0x8] sm:$0xf]
  %v1149 = vld [vmem:[%s1145 + $0xc] sm:$0xf]
  %v1150 = vld [vmem:[%s1145 + $0x10] sm:$0xf]
  %v1151 = vld [vmem:[%s1145 + $0x14] sm:$0xf]
  %v1152 = vld [vmem:[%s1145 + $0x18] sm:$0xf]
  %v1153 = vld [vmem:[%s1145 + $0x1c] sm:$0xf]
  %v1154 = vld [vmem:[%s1145 + $0x20] sm:$0xf]
  %v1155 = vld [vmem:[%s1145 + $0x24] sm:$0xf]
  %v1156 = vld [vmem:[%s1145 + $0x28] sm:$0xf]
  %v1157 = vld [vmem:[%s1145 + $0x2c] sm:$0xf]
  %v1158 = vld [vmem:[%s1145 + $0x30] sm:$0xf]
  %v1159 = vld [vmem:[%s1145 + $0x34] sm:$0xf]
  %v1160 = vld [vmem:[%s1145 + $0x38] sm:$0xf]
  %v1161 = vld [vmem:[%s1145 + $0x3c] sm:$0xf]
  %v1162 = vld [vmem:[%s1145 + $0x40] sm:$0xf]
  %v1163 = vld [vmem:[%s1145 + $0x44] sm:$0xf]
  %v1182 = vunpack.c.l.b16 %v1146
  %v1183 = vunpack.c.l.b16 %v1147
  %v1184 = vunpack.c.l.b16 %v1148
  %v1185 = vunpack.c.l.b16 %v1149
  %v1186 = vunpack.c.l.b16 %v1150
  %v1187 = vunpack.c.l.b16 %v1151
  %v1188 = vunpack.c.l.b16 %v1152
  %v1189 = vunpack.c.l.b16 %v1153
  %v1190 = vunpack.c.l.b16 %v1154
  %v1191 = vunpack.c.l.b16 %v1155
  %v1192 = vunpack.c.l.b16 %v1156
  %v1193 = vunpack.c.l.b16 %v1157
  %v1194 = vunpack.c.l.b16 %v1158
  %v1195 = vunpack.c.l.b16 %v1159
  %v1196 = vunpack.c.l.b16 %v1160
  %v1197 = vunpack.c.l.b16 %v1161
  %v1198 = vunpack.c.l.b16 %v1162
  %v1199 = vunpack.c.l.b16 %v1163
  %v1200 = vpack.c.b16 %v1183, %v1182
  %v1201 = vpack.c.b16 %v1185, %v1184
  %v1202 = vpack.c.b16 %v1187, %v1186
  %v1203 = vpack.c.b16 %v1189, %v1188
  %v1204 = vpack.c.b16 %v1191, %v1190
  %v1205 = vpack.c.b16 %v1193, %v1192
  %v1206 = vpack.c.b16 %v1195, %v1194
  %v1207 = vpack.c.b16 %v1197, %v1196
  %v1208 = vpack.c.b16 %v1199, %v1198
  %v1219 = vsel %vm632, %v1144, 0
  %1221 = vmatprep.subr.bf16.mxu0 0
  %1222 = vmatpush1.bf16.msra.mxu0 %v1207
  %1223 = vmatprep.subr.bf16.mxu0 0
  %1224 = vmatpush1.bf16.msra.mxu0 %v1206
  %1225 = vmatprep.subr.bf16.mxu0 0
  %1226 = vmatpush1.bf16.msra.mxu0 %v1205
  %1227 = vmatprep.subr.bf16.mxu0 0
  %1228 = vmatpush1.bf16.msra.mxu0 %v1204
  %1229 = vmatprep.subr.bf16.mxu0 0
  %1230 = vmatpush1.bf16.msra.mxu0 %v1203
  %1231 = vmatprep.subr.bf16.mxu0 0
  %1232 = vmatpush1.bf16.msra.mxu0 %v1202
  %1233 = vmatprep.subr.bf16.mxu0 0
  %1234 = vmatpush1.bf16.msra.mxu0 %v1201
  %1235 = vmatprep.subr.bf16.mxu0 0
  %1236 = vmatpush1.bf16.msra.mxu0 %v1200
  %1237 = vmatprep.subr.bf16.mxu0 0
  %1238 = vmatpush2.bf16.msra.mxu0 0
  %1239 = vmatprep.subr.bf16.mxu0 0
  %1240 = vmatpush2.bf16.msra.mxu0 0
  %1241 = vmatprep.subr.bf16.mxu0 0
  %1242 = vmatpush2.bf16.msra.mxu0 0
  %1243 = vmatprep.subr.bf16.mxu0 0
  %1244 = vmatpush2.bf16.msra.mxu0 0
  %1245 = vmatprep.subr.bf16.mxu0 0
  %1246 = vmatpush2.bf16.msra.mxu0 0
  %1247 = vmatprep.subr.bf16.mxu0 0
  %1248 = vmatpush2.bf16.msra.mxu0 0
  %1249 = vmatprep.subr.bf16.mxu0 0
  %1250 = vmatpush2.bf16.msra.mxu0 0
  %1251 = vmatprep.subr.bf16.mxu0 0
  %1252 = vmatpush2.bf16.msra.mxu0 %v1208
  %1253 = vmatprep.mubr.bf16.mxu0 %v771
  %1254 = vmatmul.mubr.bf16.gmra.mxu0 %v529
  %v1255 = vpop.f32.mrf.mxu0
  %v1256 = vadd.f32 0.0, %v1255
  %v1257 = vpop.f32.mrf.mxu0
  %v1258 = vpop.f32.mrf.mxu0
  %v1259 = vadd.f32 0.0, %v1258
  %v1260 = vpop.f32.mrf.mxu0
  %1261 = vmatprep.mubr.bf16.mxu0 %v774
  %1262 = vmatmul.mubr.bf16.gmra.mxu0 %v531
  %v1263 = vpop.f32.mrf.mxu0
  %v1264 = vadd.f32 0.0, %v1263
  %v1265 = vpop.f32.mrf.mxu0
  %v1266 = vpop.f32.mrf.mxu0
  %v1267 = vadd.f32 0.0, %v1266
  %v1268 = vpop.f32.mrf.mxu0
  %1269 = vmatprep.mubr.bf16.mxu0 %v917
  %1270 = vmatmul.mubr.bf16.gmra.mxu0 %v841
  %v1271 = vpop.f32.mrf.mxu0
  %v1272 = vadd.f32 0.0, %v1271
  %v1273 = vpop.f32.mrf.mxu0
  %v1274 = vpop.f32.mrf.mxu0
  %v1275 = vadd.f32 0.0, %v1274
  %v1276 = vpop.f32.mrf.mxu0
  %1277 = vmatprep.mubr.bf16.mxu0 %v1219
  %1278 = vmatmul.mubr.bf16.gmra.mxu0 %v1143
  %v1279 = vpop.f32.mrf.mxu0
  %v1280 = vadd.f32 0.0, %v1279
  %v1281 = vpop.f32.mrf.mxu0
  %v1282 = vpop.f32.mrf.mxu0
  %v1283 = vadd.f32 0.0, %v1282
  %v1284 = vpop.f32.mrf.mxu0
  %1285 = vdwg.mxu0
  %v1286 = vadd.f32 %v1135, %v1256
  %v1287 = vadd.f32 %v1136, %v1259
  %v1288 = vadd.f32 %v1137, %v1264
  %v1289 = vadd.f32 %v1138, %v1267
  %v1290 = vadd.f32 %v1139, %v1272
  %v1291 = vadd.f32 %v1140, %v1275
  %v1292 = vadd.f32 %v1141, %v1280
  %v1293 = vadd.f32 %v1142, %v1283
  %v1294 = vld [vmem:[%s4] sm:$0x1]
  %v1296 = vlaneseq
  %v1297 = vshrl.u32 %v1296, 7
  %v1298 = vsub.s32 0, %v1297
  %v1299 = vrot.slane %v1294, %v1298
  %v1301 = vadd.f32 %v1286, %v1299
  %v1302 = vadd.f32 %v1287, %v1299
  %v1303 = vadd.f32 %v1288, %v1299
  %v1304 = vadd.f32 %v1289, %v1299
  %v1305 = vadd.f32 %v1290, %v1299
  %v1306 = vadd.f32 %v1291, %v1299
  %v1307 = vadd.f32 %v1292, %v1299
  %v1308 = vadd.f32 %v1293, %v1299
  %v1309 = vtanh.pop %v1301
  %v1310 = vtanh.pop %v1302
  %v1311 = vtanh.pop %v1303
  %v1312 = vtanh.pop %v1304
  %v1313 = vtanh.pop %v1305
  %v1314 = vtanh.pop %v1306
  %v1315 = vtanh.pop %v1307
  %v1316 = vtanh.pop %v1308
  %v1317 = vadd.f32 %v1309, %v1310
  %v1318 = vmul.f32 %v1317, 0.5
  %v1319 = vpack.c.bf16 %v1318, %v1318
  %v1320 = vld [vmem:[%s5] sm:$0xff]
  %v1321 = vld [vmem:[%s5 + $0x8] sm:$0xff]
  %v1322 = vld [vmem:[%s5 + $0x10] sm:$0xff]
  %v1323 = vld [vmem:[%s5 + $0x18] sm:$0xff]
  %v1324 = vld [vmem:[%s5 + $0x20] sm:$0xff]
  %v1325 = vld [vmem:[%s5 + $0x28] sm:$0xff]
  %v1326 = vld [vmem:[%s5 + $0x30] sm:$0xff]
  %v1327 = vld [vmem:[%s5 + $0x38] sm:$0xff]
  %v1328 = vld [vmem:[%s5 + $0x40] sm:$0xff]
  %v1329 = vld [vmem:[%s5 + $0x48] sm:$0xff]
  %v1330 = vld [vmem:[%s5 + $0x50] sm:$0xff]
  %v1331 = vld [vmem:[%s5 + $0x58] sm:$0xff]
  %v1332 = vld [vmem:[%s5 + $0x60] sm:$0xff]
  %v1333 = vld [vmem:[%s5 + $0x68] sm:$0xff]
  %v1334 = vld [vmem:[%s5 + $0x70] sm:$0xff]
  %v1335 = vld [vmem:[%s5 + $0x78] sm:$0xff]
  %v1336 = vadd.f32 %v1311, %v1312
  %v1337 = vmul.f32 %v1336, 0.5
  %v1338 = vpack.c.bf16 %v1337, %v1337
  %s1339 = scalar_lea.vmem %s5, 128
  %v1340 = vld [vmem:[%s1339] sm:$0xff]
  %v1341 = vld [vmem:[%s1339 + $0x8] sm:$0xff]
  %v1342 = vld [vmem:[%s1339 + $0x10] sm:$0xff]
  %v1343 = vld [vmem:[%s1339 + $0x18] sm:$0xff]
  %v1344 = vld [vmem:[%s1339 + $0x20] sm:$0xff]
  %v1345 = vld [vmem:[%s1339 + $0x28] sm:$0xff]
  %v1346 = vld [vmem:[%s1339 + $0x30] sm:$0xff]
  %v1347 = vld [vmem:[%s1339 + $0x38] sm:$0xff]
  %v1348 = vld [vmem:[%s1339 + $0x40] sm:$0xff]
  %v1349 = vld [vmem:[%s1339 + $0x48] sm:$0xff]
  %v1350 = vld [vmem:[%s1339 + $0x50] sm:$0xff]
  %v1351 = vld [vmem:[%s1339 + $0x58] sm:$0xff]
  %v1352 = vld [vmem:[%s1339 + $0x60] sm:$0xff]
  %v1353 = vld [vmem:[%s1339 + $0x68] sm:$0xff]
  %v1354 = vld [vmem:[%s1339 + $0x70] sm:$0xff]
  %v1355 = vld [vmem:[%s1339 + $0x78] sm:$0xff]
  %v1372 = vunpack.c.l.b16 %v1340
  %v1373 = vunpack.c.h.b16 %v1340
  %v1374 = vunpack.c.l.b16 %v1341
  %v1375 = vunpack.c.h.b16 %v1341
  %v1376 = vunpack.c.l.b16 %v1342
  %v1377 = vunpack.c.h.b16 %v1342
  %v1378 = vunpack.c.l.b16 %v1343
  %v1379 = vunpack.c.h.b16 %v1343
  %v1380 = vunpack.c.l.b16 %v1344
  %v1381 = vunpack.c.h.b16 %v1344
  %v1382 = vunpack.c.l.b16 %v1345
  %v1383 = vunpack.c.h.b16 %v1345
  %v1384 = vunpack.c.l.b16 %v1346
  %v1385 = vunpack.c.h.b16 %v1346
  %v1386 = vunpack.c.l.b16 %v1347
  %v1387 = vunpack.c.h.b16 %v1347
  %v1388 = vunpack.c.l.b16 %v1348
  %v1389 = vunpack.c.h.b16 %v1348
  %v1390 = vunpack.c.l.b16 %v1349
  %v1391 = vunpack.c.h.b16 %v1349
  %v1392 = vunpack.c.l.b16 %v1350
  %v1393 = vunpack.c.h.b16 %v1350
  %v1394 = vunpack.c.l.b16 %v1351
  %v1395 = vunpack.c.h.b16 %v1351
  %v1396 = vunpack.c.l.b16 %v1352
  %v1397 = vunpack.c.h.b16 %v1352
  %v1398 = vunpack.c.l.b16 %v1353
  %v1399 = vunpack.c.h.b16 %v1353
  %v1400 = vunpack.c.l.b16 %v1354
  %v1401 = vunpack.c.h.b16 %v1354
  %v1402 = vunpack.c.l.b16 %v1355
  %v1403 = vunpack.c.h.b16 %v1355
  %v1404 = vpack.c.b16 %v1374, %v1372
  %v1405 = vpack.c.b16 %v1375, %v1373
  %v1406 = vpack.c.b16 %v1378, %v1376
  %v1407 = vpack.c.b16 %v1379, %v1377
  %v1408 = vpack.c.b16 %v1382, %v1380
  %v1409 = vpack.c.b16 %v1383, %v1381
  %v1410 = vpack.c.b16 %v1386, %v1384
  %v1411 = vpack.c.b16 %v1387, %v1385
  %v1412 = vpack.c.b16 %v1390, %v1388
  %v1413 = vpack.c.b16 %v1391, %v1389
  %v1414 = vpack.c.b16 %v1394, %v1392
  %v1415 = vpack.c.b16 %v1395, %v1393
  %v1416 = vpack.c.b16 %v1398, %v1396
  %v1417 = vpack.c.b16 %v1399, %v1397
  %v1418 = vpack.c.b16 %v1402, %v1400
  %v1419 = vpack.c.b16 %v1403, %v1401
  %1436 = vmatprep.subr.bf16.mxu0 %v1419
  %1437 = vmatpush1.bf16.msra.mxu0 %v1418
  %1438 = vmatprep.subr.bf16.mxu0 %v1417
  %1439 = vmatpush1.bf16.msra.mxu0 %v1416
  %1440 = vmatprep.subr.bf16.mxu0 %v1415
  %1441 = vmatpush1.bf16.msra.mxu0 %v1414
  %1442 = vmatprep.subr.bf16.mxu0 %v1413
  %1443 = vmatpush1.bf16.msra.mxu0 %v1412
  %1444 = vmatprep.subr.bf16.mxu0 %v1411
  %1445 = vmatpush1.bf16.msra.mxu0 %v1410
  %1446 = vmatprep.subr.bf16.mxu0 %v1409
  %1447 = vmatpush1.bf16.msra.mxu0 %v1408
  %1448 = vmatprep.subr.bf16.mxu0 %v1407
  %1449 = vmatpush1.bf16.msra.mxu0 %v1406
  %1450 = vmatprep.subr.bf16.mxu0 %v1405
  %1451 = vmatpush1.bf16.msra.mxu0 %v1404
  %1452 = vmatprep.subr.bf16.mxu0 0
  %1453 = vmatpush2.bf16.msra.mxu0 0
  %1454 = vmatprep.subr.bf16.mxu0 0
  %1455 = vmatpush2.bf16.msra.mxu0 0
  %1456 = vmatprep.subr.bf16.mxu0 0
  %1457 = vmatpush2.bf16.msra.mxu0 0
  %1458 = vmatprep.subr.bf16.mxu0 0
  %1459 = vmatpush2.bf16.msra.mxu0 0
  %1460 = vmatprep.subr.bf16.mxu0 0
  %1461 = vmatpush2.bf16.msra.mxu0 0
  %1462 = vmatprep.subr.bf16.mxu0 0
  %1463 = vmatpush2.bf16.msra.mxu0 0
  %1464 = vmatprep.subr.bf16.mxu0 0
  %1465 = vmatpush2.bf16.msra.mxu0 0
  %1466 = vmatprep.subr.bf16.mxu0 0
  %1467 = vmatpush2.bf16.msra.mxu0 0
  %1468 = vmatprep.mubr.bf16.mxu0 0
  %1469 = vmatmul.mubr.bf16.gmra.mxu0 %v1338
  %v1470 = vpop.f32.mrf.mxu0
  %v1471 = vadd.f32 0.0, %v1470
  %v1472 = vpop.f32.mrf.mxu0
  %v1473 = vadd.f32 0.0, %v1472
  %v1474 = vpop.f32.mrf.mxu0
  %v1475 = vpop.f32.mrf.mxu0
  %1476 = vdwg.mxu0
  %v1493 = vunpack.c.l.b16 %v1320
  %v1494 = vunpack.c.h.b16 %v1320
  %v1495 = vunpack.c.l.b16 %v1321
  %v1496 = vunpack.c.h.b16 %v1321
  %v1497 = vunpack.c.l.b16 %v1322
  %v1498 = vunpack.c.h.b16 %v1322
  %v1499 = vunpack.c.l.b16 %v1323
  %v1500 = vunpack.c.h.b16 %v1323
  %v1501 = vunpack.c.l.b16 %v1324
  %v1502 = vunpack.c.h.b16 %v1324
  %v1503 = vunpack.c.l.b16 %v1325
  %v1504 = vunpack.c.h.b16 %v1325
  %v1505 = vunpack.c.l.b16 %v1326
  %v1506 = vunpack.c.h.b16 %v1326
  %v1507 = vunpack.c.l.b16 %v1327
  %v1508 = vunpack.c.h.b16 %v1327
  %v1509 = vunpack.c.l.b16 %v1328
  %v1510 = vunpack.c.h.b16 %v1328
  %v1511 = vunpack.c.l.b16 %v1329
  %v1512 = vunpack.c.h.b16 %v1329
  %v1513 = vunpack.c.l.b16 %v1330
  %v1514 = vunpack.c.h.b16 %v1330
  %v1515 = vunpack.c.l.b16 %v1331
  %v1516 = vunpack.c.h.b16 %v1331
  %v1517 = vunpack.c.l.b16 %v1332
  %v1518 = vunpack.c.h.b16 %v1332
  %v1519 = vunpack.c.l.b16 %v1333
  %v1520 = vunpack.c.h.b16 %v1333
  %v1521 = vunpack.c.l.b16 %v1334
  %v1522 = vunpack.c.h.b16 %v1334
  %v1523 = vunpack.c.l.b16 %v1335
  %v1524 = vunpack.c.h.b16 %v1335
  %v1525 = vpack.c.b16 %v1495, %v1493
  %v1526 = vpack.c.b16 %v1496, %v1494
  %v1527 = vpack.c.b16 %v1499, %v1497
  %v1528 = vpack.c.b16 %v1500, %v1498
  %v1529 = vpack.c.b16 %v1503, %v1501
  %v1530 = vpack.c.b16 %v1504, %v1502
  %v1531 = vpack.c.b16 %v1507, %v1505
  %v1532 = vpack.c.b16 %v1508, %v1506
  %v1533 = vpack.c.b16 %v1511, %v1509
  %v1534 = vpack.c.b16 %v1512, %v1510
  %v1535 = vpack.c.b16 %v1515, %v1513
  %v1536 = vpack.c.b16 %v1516, %v1514
  %v1537 = vpack.c.b16 %v1519, %v1517
  %v1538 = vpack.c.b16 %v1520, %v1518
  %v1539 = vpack.c.b16 %v1523, %v1521
  %v1540 = vpack.c.b16 %v1524, %v1522
  %1557 = vmatprep.subr.bf16.mxu0 %v1540
  %1558 = vmatpush1.bf16.msra.mxu0 %v1539
  %1559 = vmatprep.subr.bf16.mxu0 %v1538
  %1560 = vmatpush1.bf16.msra.mxu0 %v1537
  %1561 = vmatprep.subr.bf16.mxu0 %v1536
  %1562 = vmatpush1.bf16.msra.mxu0 %v1535
  %1563 = vmatprep.subr.bf16.mxu0 %v1534
  %1564 = vmatpush1.bf16.msra.mxu0 %v1533
  %1565 = vmatprep.subr.bf16.mxu0 %v1532
  %1566 = vmatpush1.bf16.msra.mxu0 %v1531
  %1567 = vmatprep.subr.bf16.mxu0 %v1530
  %1568 = vmatpush1.bf16.msra.mxu0 %v1529
  %1569 = vmatprep.subr.bf16.mxu0 %v1528
  %1570 = vmatpush1.bf16.msra.mxu0 %v1527
  %1571 = vmatprep.subr.bf16.mxu0 %v1526
  %1572 = vmatpush1.bf16.msra.mxu0 %v1525
  %1573 = vmatprep.subr.bf16.mxu0 0
  %1574 = vmatpush2.bf16.msra.mxu0 0
  %1575 = vmatprep.subr.bf16.mxu0 0
  %1576 = vmatpush2.bf16.msra.mxu0 0
  %1577 = vmatprep.subr.bf16.mxu0 0
  %1578 = vmatpush2.bf16.msra.mxu0 0
  %1579 = vmatprep.subr.bf16.mxu0 0
  %1580 = vmatpush2.bf16.msra.mxu0 0
  %1581 = vmatprep.subr.bf16.mxu0 0
  %1582 = vmatpush2.bf16.msra.mxu0 0
  %1583 = vmatprep.subr.bf16.mxu0 0
  %1584 = vmatpush2.bf16.msra.mxu0 0
  %1585 = vmatprep.subr.bf16.mxu0 0
  %1586 = vmatpush2.bf16.msra.mxu0 0
  %1587 = vmatprep.subr.bf16.mxu0 0
  %1588 = vmatpush2.bf16.msra.mxu0 0
  %1589 = vmatprep.mubr.bf16.mxu0 0
  %1590 = vmatmul.mubr.bf16.gmra.mxu0 %v1319
  %v1591 = vpop.f32.mrf.mxu0
  %v1592 = vadd.f32 %v1471, %v1591
  %v1593 = vpop.f32.mrf.mxu0
  %v1594 = vadd.f32 %v1473, %v1593
  %v1595 = vpop.f32.mrf.mxu0
  %v1596 = vpop.f32.mrf.mxu0
  %1597 = vdwg.mxu0
  %v1598 = vadd.f32 %v1313, %v1314
  %v1599 = vmul.f32 %v1598, 0.5
  %v1600 = vpack.c.bf16 %v1599, %v1599
  %s1601 = scalar_lea.vmem %s5, 256
  %v1602 = vld [vmem:[%s1601] sm:$0xff]
  %v1603 = vld [vmem:[%s1601 + $0x8] sm:$0xff]
  %v1604 = vld [vmem:[%s1601 + $0x10] sm:$0xff]
  %v1605 = vld [vmem:[%s1601 + $0x18] sm:$0xff]
  %v1606 = vld [vmem:[%s1601 + $0x20] sm:$0xff]
  %v1607 = vld [vmem:[%s1601 + $0x28] sm:$0xff]
  %v1608 = vld [vmem:[%s1601 + $0x30] sm:$0xff]
  %v1609 = vld [vmem:[%s1601 + $0x38] sm:$0xff]
  %v1610 = vld [vmem:[%s1601 + $0x40] sm:$0xff]
  %v1611 = vld [vmem:[%s1601 + $0x48] sm:$0xff]
  %v1612 = vld [vmem:[%s1601 + $0x50] sm:$0xff]
  %v1613 = vld [vmem:[%s1601 + $0x58] sm:$0xff]
  %v1614 = vld [vmem:[%s1601 + $0x60] sm:$0xff]
  %v1615 = vld [vmem:[%s1601 + $0x68] sm:$0xff]
  %v1616 = vld [vmem:[%s1601 + $0x70] sm:$0xff]
  %v1617 = vld [vmem:[%s1601 + $0x78] sm:$0xff]
  %v1634 = vunpack.c.l.b16 %v1602
  %v1635 = vunpack.c.h.b16 %v1602
  %v1636 = vunpack.c.l.b16 %v1603
  %v1637 = vunpack.c.h.b16 %v1603
  %v1638 = vunpack.c.l.b16 %v1604
  %v1639 = vunpack.c.h.b16 %v1604
  %v1640 = vunpack.c.l.b16 %v1605
  %v1641 = vunpack.c.h.b16 %v1605
  %v1642 = vunpack.c.l.b16 %v1606
  %v1643 = vunpack.c.h.b16 %v1606
  %v1644 = vunpack.c.l.b16 %v1607
  %v1645 = vunpack.c.h.b16 %v1607
  %v1646 = vunpack.c.l.b16 %v1608
  %v1647 = vunpack.c.h.b16 %v1608
  %v1648 = vunpack.c.l.b16 %v1609
  %v1649 = vunpack.c.h.b16 %v1609
  %v1650 = vunpack.c.l.b16 %v1610
  %v1651 = vunpack.c.h.b16 %v1610
  %v1652 = vunpack.c.l.b16 %v1611
  %v1653 = vunpack.c.h.b16 %v1611
  %v1654 = vunpack.c.l.b16 %v1612
  %v1655 = vunpack.c.h.b16 %v1612
  %v1656 = vunpack.c.l.b16 %v1613
  %v1657 = vunpack.c.h.b16 %v1613
  %v1658 = vunpack.c.l.b16 %v1614
  %v1659 = vunpack.c.h.b16 %v1614
  %v1660 = vunpack.c.l.b16 %v1615
  %v1661 = vunpack.c.h.b16 %v1615
  %v1662 = vunpack.c.l.b16 %v1616
  %v1663 = vunpack.c.h.b16 %v1616
  %v1664 = vunpack.c.l.b16 %v1617
  %v1665 = vunpack.c.h.b16 %v1617
  %v1666 = vpack.c.b16 %v1636, %v1634
  %v1667 = vpack.c.b16 %v1637, %v1635
  %v1668 = vpack.c.b16 %v1640, %v1638
  %v1669 = vpack.c.b16 %v1641, %v1639
  %v1670 = vpack.c.b16 %v1644, %v1642
  %v1671 = vpack.c.b16 %v1645, %v1643
  %v1672 = vpack.c.b16 %v1648, %v1646
  %v1673 = vpack.c.b16 %v1649, %v1647
  %v1674 = vpack.c.b16 %v1652, %v1650
  %v1675 = vpack.c.b16 %v1653, %v1651
  %v1676 = vpack.c.b16 %v1656, %v1654
  %v1677 = vpack.c.b16 %v1657, %v1655
  %v1678 = vpack.c.b16 %v1660, %v1658
  %v1679 = vpack.c.b16 %v1661, %v1659
  %v1680 = vpack.c.b16 %v1664, %v1662
  %v1681 = vpack.c.b16 %v1665, %v1663
  %1698 = vmatprep.subr.bf16.mxu0 %v1681
  %1699 = vmatpush1.bf16.msra.mxu0 %v1680
  %1700 = vmatprep.subr.bf16.mxu0 %v1679
  %1701 = vmatpush1.bf16.msra.mxu0 %v1678
  %1702 = vmatprep.subr.bf16.mxu0 %v1677
  %1703 = vmatpush1.bf16.msra.mxu0 %v1676
  %1704 = vmatprep.subr.bf16.mxu0 %v1675
  %1705 = vmatpush1.bf16.msra.mxu0 %v1674
  %1706 = vmatprep.subr.bf16.mxu0 %v1673
  %1707 = vmatpush1.bf16.msra.mxu0 %v1672
  %1708 = vmatprep.subr.bf16.mxu0 %v1671
  %1709 = vmatpush1.bf16.msra.mxu0 %v1670
  %1710 = vmatprep.subr.bf16.mxu0 %v1669
  %1711 = vmatpush1.bf16.msra.mxu0 %v1668
  %1712 = vmatprep.subr.bf16.mxu0 %v1667
  %1713 = vmatpush1.bf16.msra.mxu0 %v1666
  %1714 = vmatprep.subr.bf16.mxu0 0
  %1715 = vmatpush2.bf16.msra.mxu0 0
  %1716 = vmatprep.subr.bf16.mxu0 0
  %1717 = vmatpush2.bf16.msra.mxu0 0
  %1718 = vmatprep.subr.bf16.mxu0 0
  %1719 = vmatpush2.bf16.msra.mxu0 0
  %1720 = vmatprep.subr.bf16.mxu0 0
  %1721 = vmatpush2.bf16.msra.mxu0 0
  %1722 = vmatprep.subr.bf16.mxu0 0
  %1723 = vmatpush2.bf16.msra.mxu0 0
  %1724 = vmatprep.subr.bf16.mxu0 0
  %1725 = vmatpush2.bf16.msra.mxu0 0
  %1726 = vmatprep.subr.bf16.mxu0 0
  %1727 = vmatpush2.bf16.msra.mxu0 0
  %1728 = vmatprep.subr.bf16.mxu0 0
  %1729 = vmatpush2.bf16.msra.mxu0 0
  %1730 = vmatprep.mubr.bf16.mxu0 0
  %1731 = vmatmul.mubr.bf16.gmra.mxu0 %v1600
  %v1732 = vpop.f32.mrf.mxu0
  %v1733 = vadd.f32 0.0, %v1732
  %v1734 = vpop.f32.mrf.mxu0
  %v1735 = vadd.f32 0.0, %v1734
  %v1736 = vpop.f32.mrf.mxu0
  %v1737 = vpop.f32.mrf.mxu0
  %1738 = vdwg.mxu0
  %v1739 = vadd.f32 %v1592, %v1733
  %v1740 = vadd.f32 %v1594, %v1735
  %v1741 = vadd.f32 %v1315, %v1316
  %v1742 = vmul.f32 %v1741, 0.5
  %v1743 = vpack.c.bf16 %v1742, %v1742
  %s1744 = scalar_lea.vmem %s5, 384
  %v1745 = vld [vmem:[%s1744] sm:$0xff]
  %v1746 = vld [vmem:[%s1744 + $0x8] sm:$0xff]
  %v1747 = vld [vmem:[%s1744 + $0x10] sm:$0xff]
  %v1748 = vld [vmem:[%s1744 + $0x18] sm:$0xff]
  %v1749 = vld [vmem:[%s1744 + $0x20] sm:$0xff]
  %v1750 = vld [vmem:[%s1744 + $0x28] sm:$0xff]
  %v1751 = vld [vmem:[%s1744 + $0x30] sm:$0xff]
  %v1752 = vld [vmem:[%s1744 + $0x38] sm:$0xff]
  %v1753 = vld [vmem:[%s1744 + $0x40] sm:$0xff]
  %v1754 = vld [vmem:[%s1744 + $0x48] sm:$0xff]
  %v1755 = vld [vmem:[%s1744 + $0x50] sm:$0xff]
  %v1756 = vld [vmem:[%s1744 + $0x58] sm:$0xff]
  %v1757 = vld [vmem:[%s1744 + $0x60] sm:$0xff]
  %v1758 = vld [vmem:[%s1744 + $0x68] sm:$0xff]
  %v1759 = vld [vmem:[%s1744 + $0x70] sm:$0xff]
  %v1760 = vld [vmem:[%s1744 + $0x78] sm:$0xff]
  %v1777 = vunpack.c.l.b16 %v1745
  %v1778 = vunpack.c.h.b16 %v1745
  %v1779 = vunpack.c.l.b16 %v1746
  %v1780 = vunpack.c.h.b16 %v1746
  %v1781 = vunpack.c.l.b16 %v1747
  %v1782 = vunpack.c.h.b16 %v1747
  %v1783 = vunpack.c.l.b16 %v1748
  %v1784 = vunpack.c.h.b16 %v1748
  %v1785 = vunpack.c.l.b16 %v1749
  %v1786 = vunpack.c.h.b16 %v1749
  %v1787 = vunpack.c.l.b16 %v1750
  %v1788 = vunpack.c.h.b16 %v1750
  %v1789 = vunpack.c.l.b16 %v1751
  %v1790 = vunpack.c.h.b16 %v1751
  %v1791 = vunpack.c.l.b16 %v1752
  %v1792 = vunpack.c.h.b16 %v1752
  %v1793 = vunpack.c.l.b16 %v1753
  %v1794 = vunpack.c.h.b16 %v1753
  %v1795 = vunpack.c.l.b16 %v1754
  %v1796 = vunpack.c.h.b16 %v1754
  %v1797 = vunpack.c.l.b16 %v1755
  %v1798 = vunpack.c.h.b16 %v1755
  %v1799 = vunpack.c.l.b16 %v1756
  %v1800 = vunpack.c.h.b16 %v1756
  %v1801 = vunpack.c.l.b16 %v1757
  %v1802 = vunpack.c.h.b16 %v1757
  %v1803 = vunpack.c.l.b16 %v1758
  %v1804 = vunpack.c.h.b16 %v1758
  %v1805 = vunpack.c.l.b16 %v1759
  %v1806 = vunpack.c.h.b16 %v1759
  %v1807 = vunpack.c.l.b16 %v1760
  %v1808 = vunpack.c.h.b16 %v1760
  %v1809 = vpack.c.b16 %v1779, %v1777
  %v1810 = vpack.c.b16 %v1780, %v1778
  %v1811 = vpack.c.b16 %v1783, %v1781
  %v1812 = vpack.c.b16 %v1784, %v1782
  %v1813 = vpack.c.b16 %v1787, %v1785
  %v1814 = vpack.c.b16 %v1788, %v1786
  %v1815 = vpack.c.b16 %v1791, %v1789
  %v1816 = vpack.c.b16 %v1792, %v1790
  %v1817 = vpack.c.b16 %v1795, %v1793
  %v1818 = vpack.c.b16 %v1796, %v1794
  %v1819 = vpack.c.b16 %v1799, %v1797
  %v1820 = vpack.c.b16 %v1800, %v1798
  %v1821 = vpack.c.b16 %v1803, %v1801
  %v1822 = vpack.c.b16 %v1804, %v1802
  %v1823 = vpack.c.b16 %v1807, %v1805
  %v1824 = vpack.c.b16 %v1808, %v1806
  %1841 = vmatprep.subr.bf16.mxu0 %v1824
  %1842 = vmatpush1.bf16.msra.mxu0 %v1823
  %1843 = vmatprep.subr.bf16.mxu0 %v1822
  %1844 = vmatpush1.bf16.msra.mxu0 %v1821
  %1845 = vmatprep.subr.bf16.mxu0 %v1820
  %1846 = vmatpush1.bf16.msra.mxu0 %v1819
  %1847 = vmatprep.subr.bf16.mxu0 %v1818
  %1848 = vmatpush1.bf16.msra.mxu0 %v1817
  %1849 = vmatprep.subr.bf16.mxu0 %v1816
  %1850 = vmatpush1.bf16.msra.mxu0 %v1815
  %1851 = vmatprep.subr.bf16.mxu0 %v1814
  %1852 = vmatpush1.bf16.msra.mxu0 %v1813
  %1853 = vmatprep.subr.bf16.mxu0 %v1812
  %1854 = vmatpush1.bf16.msra.mxu0 %v1811
  %1855 = vmatprep.subr.bf16.mxu0 %v1810
  %1856 = vmatpush1.bf16.msra.mxu0 %v1809
  %1857 = vmatprep.subr.bf16.mxu0 0
  %1858 = vmatpush2.bf16.msra.mxu0 0
  %1859 = vmatprep.subr.bf16.mxu0 0
  %1860 = vmatpush2.bf16.msra.mxu0 0
  %1861 = vmatprep.subr.bf16.mxu0 0
  %1862 = vmatpush2.bf16.msra.mxu0 0
  %1863 = vmatprep.subr.bf16.mxu0 0
  %1864 = vmatpush2.bf16.msra.mxu0 0
  %1865 = vmatprep.subr.bf16.mxu0 0
  %1866 = vmatpush2.bf16.msra.mxu0 0
  %1867 = vmatprep.subr.bf16.mxu0 0
  %1868 = vmatpush2.bf16.msra.mxu0 0
  %1869 = vmatprep.subr.bf16.mxu0 0
  %1870 = vmatpush2.bf16.msra.mxu0 0
  %1871 = vmatprep.subr.bf16.mxu0 0
  %1872 = vmatpush2.bf16.msra.mxu0 0
  %1873 = vmatprep.mubr.bf16.mxu0 0
  %1874 = vmatmul.mubr.bf16.gmra.mxu0 %v1743
  %v1875 = vpop.f32.mrf.mxu0
  %v1876 = vadd.f32 0.0, %v1875
  %v1877 = vpop.f32.mrf.mxu0
  %v1878 = vadd.f32 0.0, %v1877
  %v1879 = vpop.f32.mrf.mxu0
  %v1880 = vpop.f32.mrf.mxu0
  %1881 = vdwg.mxu0
  %v1882 = vadd.f32 %v1739, %v1876
  %v1883 = vadd.f32 %v1740, %v1878
  %v1884 = vtanh.pop %v1882
  %v1885 = vtanh.pop %v1883
  %v1886 = vpack.c.bf16 %v1884, %v1884
  %v1887 = vpack.c.bf16 %v1885, %v1885
  %v1888 = vld [vmem:[%s6] sm:$0xf]
  %v1889 = vld [vmem:[%s6 + $0x4] sm:$0xf]
  %v1890 = vld [vmem:[%s6 + $0x8] sm:$0xf]
  %v1891 = vld [vmem:[%s6 + $0xc] sm:$0xf]
  %v1892 = vld [vmem:[%s6 + $0x10] sm:$0xf]
  %v1893 = vld [vmem:[%s6 + $0x14] sm:$0xf]
  %v1894 = vld [vmem:[%s6 + $0x18] sm:$0xf]
  %v1895 = vld [vmem:[%s6 + $0x1c] sm:$0xf]
  %v1896 = vld [vmem:[%s6 + $0x20] sm:$0xf]
  %v1897 = vld [vmem:[%s6 + $0x24] sm:$0xf]
  %v1898 = vld [vmem:[%s6 + $0x28] sm:$0xf]
  %v1899 = vld [vmem:[%s6 + $0x2c] sm:$0xf]
  %v1900 = vld [vmem:[%s6 + $0x30] sm:$0xf]
  %v1901 = vld [vmem:[%s6 + $0x34] sm:$0xf]
  %v1902 = vld [vmem:[%s6 + $0x38] sm:$0xf]
  %v1903 = vld [vmem:[%s6 + $0x3c] sm:$0xf]
  %v1904 = vld [vmem:[%s6 + $0x40] sm:$0xf]
  %v1905 = vld [vmem:[%s6 + $0x44] sm:$0xf]
  %v1906 = vld [vmem:[%s6 + $0x48] sm:$0xf]
  %v1907 = vld [vmem:[%s6 + $0x4c] sm:$0xf]
  %v1908 = vld [vmem:[%s6 + $0x50] sm:$0xf]
  %v1909 = vld [vmem:[%s6 + $0x54] sm:$0xf]
  %v1910 = vld [vmem:[%s6 + $0x58] sm:$0xf]
  %v1911 = vld [vmem:[%s6 + $0x5c] sm:$0xf]
  %v1912 = vld [vmem:[%s6 + $0x60] sm:$0xf]
  %v1913 = vld [vmem:[%s6 + $0x64] sm:$0xf]
  %v1914 = vld [vmem:[%s6 + $0x68] sm:$0xf]
  %v1915 = vld [vmem:[%s6 + $0x6c] sm:$0xf]
  %v1916 = vld [vmem:[%s6 + $0x70] sm:$0xf]
  %v1917 = vld [vmem:[%s6 + $0x74] sm:$0xf]
  %v1918 = vld [vmem:[%s6 + $0x78] sm:$0xf]
  %v1919 = vld [vmem:[%s6 + $0x7c] sm:$0xf]
  %v1920 = vld [vmem:[%s7] sm:$0x1]
  %v1922 = vlaneseq
  %v1923 = vshrl.u32 %v1922, 7
  %v1924 = vsub.s32 0, %v1923
  %v1925 = vrot.slane %v1920, %v1924
  %v1959 = vunpack.c.l.b16 %v1888
  %v1960 = vunpack.c.l.b16 %v1889
  %v1961 = vunpack.c.l.b16 %v1890
  %v1962 = vunpack.c.l.b16 %v1891
  %v1963 = vunpack.c.l.b16 %v1892
  %v1964 = vunpack.c.l.b16 %v1893
  %v1965 = vunpack.c.l.b16 %v1894
  %v1966 = vunpack.c.l.b16 %v1895
  %v1967 = vunpack.c.l.b16 %v1896
  %v1968 = vunpack.c.l.b16 %v1897
  %v1969 = vunpack.c.l.b16 %v1898
  %v1970 = vunpack.c.l.b16 %v1899
  %v1971 = vunpack.c.l.b16 %v1900
  %v1972 = vunpack.c.l.b16 %v1901
  %v1973 = vunpack.c.l.b16 %v1902
  %v1974 = vunpack.c.l.b16 %v1903
  %v1975 = vunpack.c.l.b16 %v1904
  %v1976 = vunpack.c.l.b16 %v1905
  %v1977 = vunpack.c.l.b16 %v1906
  %v1978 = vunpack.c.l.b16 %v1907
  %v1979 = vunpack.c.l.b16 %v1908
  %v1980 = vunpack.c.l.b16 %v1909
  %v1981 = vunpack.c.l.b16 %v1910
  %v1982 = vunpack.c.l.b16 %v1911
  %v1983 = vunpack.c.l.b16 %v1912
  %v1984 = vunpack.c.l.b16 %v1913
  %v1985 = vunpack.c.l.b16 %v1914
  %v1986 = vunpack.c.l.b16 %v1915
  %v1987 = vunpack.c.l.b16 %v1916
  %v1988 = vunpack.c.l.b16 %v1917
  %v1989 = vunpack.c.l.b16 %v1918
  %v1990 = vunpack.c.l.b16 %v1919
  %v1991 = vpack.c.b16 %v1960, %v1959
  %v1992 = vpack.c.b16 %v1962, %v1961
  %v1993 = vpack.c.b16 %v1964, %v1963
  %v1994 = vpack.c.b16 %v1966, %v1965
  %v1995 = vpack.c.b16 %v1968, %v1967
  %v1996 = vpack.c.b16 %v1970, %v1969
  %v1997 = vpack.c.b16 %v1972, %v1971
  %v1998 = vpack.c.b16 %v1974, %v1973
  %v1999 = vpack.c.b16 %v1976, %v1975
  %v2000 = vpack.c.b16 %v1978, %v1977
  %v2001 = vpack.c.b16 %v1980, %v1979
  %v2002 = vpack.c.b16 %v1982, %v1981
  %v2003 = vpack.c.b16 %v1984, %v1983
  %v2004 = vpack.c.b16 %v1986, %v1985
  %v2005 = vpack.c.b16 %v1988, %v1987
  %v2006 = vpack.c.b16 %v1990, %v1989
  %2023 = vmatprep.subr.bf16.mxu0 0
  %2024 = vmatpush1.bf16.msra.mxu0 %v1998
  %2025 = vmatprep.subr.bf16.mxu0 0
  %2026 = vmatpush1.bf16.msra.mxu0 %v1997
  %2027 = vmatprep.subr.bf16.mxu0 0
  %2028 = vmatpush1.bf16.msra.mxu0 %v1996
  %2029 = vmatprep.subr.bf16.mxu0 0
  %2030 = vmatpush1.bf16.msra.mxu0 %v1995
  %2031 = vmatprep.subr.bf16.mxu0 0
  %2032 = vmatpush1.bf16.msra.mxu0 %v1994
  %2033 = vmatprep.subr.bf16.mxu0 0
  %2034 = vmatpush1.bf16.msra.mxu0 %v1993
  %2035 = vmatprep.subr.bf16.mxu0 0
  %2036 = vmatpush1.bf16.msra.mxu0 %v1992
  %2037 = vmatprep.subr.bf16.mxu0 0
  %2038 = vmatpush1.bf16.msra.mxu0 %v1991
  %2039 = vmatprep.subr.bf16.mxu0 0
  %2040 = vmatpush2.bf16.msra.mxu0 %v2006
  %2041 = vmatprep.subr.bf16.mxu0 0
  %2042 = vmatpush2.bf16.msra.mxu0 %v2005
  %2043 = vmatprep.subr.bf16.mxu0 0
  %2044 = vmatpush2.bf16.msra.mxu0 %v2004
  %2045 = vmatprep.subr.bf16.mxu0 0
  %2046 = vmatpush2.bf16.msra.mxu0 %v2003
  %2047 = vmatprep.subr.bf16.mxu0 0
  %2048 = vmatpush2.bf16.msra.mxu0 %v2002
  %2049 = vmatprep.subr.bf16.mxu0 0
  %2050 = vmatpush2.bf16.msra.mxu0 %v2001
  %2051 = vmatprep.subr.bf16.mxu0 0
  %2052 = vmatpush2.bf16.msra.mxu0 %v2000
  %2053 = vmatprep.subr.bf16.mxu0 0
  %2054 = vmatpush2.bf16.msra.mxu0 %v1999
  %2055 = vmatprep.mubr.bf16.mxu0 %v1887
  %2056 = vmatmul.mubr.bf16.gmra.mxu0 %v1886
  %v2057 = vpop.f32.mrf.mxu0
  %v2058 = vadd.f32 %v1925, %v2057
  %v2059 = vpop.f32.mrf.mxu0
  %v2060 = vpop.f32.mrf.mxu0
  %v2061 = vpop.f32.mrf.mxu0
  %2062 = vdwg.mxu0
  %v2063 = vtanh.pop %v2058
  %v2064 = vpack.c.bf16 %v2063, %v2063
  %v2065 = vld [vmem:[%s8] sm:$0xf]
  %v2066 = vld [vmem:[%s8 + $0x4] sm:$0xf]
  %v2067 = vld [vmem:[%s8 + $0x8] sm:$0xf]
  %v2068 = vld [vmem:[%s8 + $0xc] sm:$0xf]
  %v2069 = vld [vmem:[%s8 + $0x10] sm:$0xf]
  %v2070 = vld [vmem:[%s8 + $0x14] sm:$0xf]
  %v2071 = vld [vmem:[%s8 + $0x18] sm:$0xf]
  %v2072 = vld [vmem:[%s8 + $0x1c] sm:$0xf]
  %v2073 = vld [vmem:[%s8 + $0x20] sm:$0xf]
  %v2074 = vld [vmem:[%s8 + $0x24] sm:$0xf]
  %v2075 = vld [vmem:[%s8 + $0x28] sm:$0xf]
  %v2076 = vld [vmem:[%s8 + $0x2c] sm:$0xf]
  %v2077 = vld [vmem:[%s8 + $0x30] sm:$0xf]
  %v2078 = vld [vmem:[%s8 + $0x34] sm:$0xf]
  %v2079 = vld [vmem:[%s8 + $0x38] sm:$0xf]
  %v2080 = vld [vmem:[%s8 + $0x3c] sm:$0xf]
  %v2081 = vld [vmem:[%s9] sm:$0x1]
  %v2083 = vlaneseq
  %v2084 = vshrl.u32 %v2083, 7
  %v2085 = vsub.s32 0, %v2084
  %v2086 = vrot.slane %v2081, %v2085
  %v2104 = vunpack.c.l.b16 %v2065
  %v2105 = vunpack.c.l.b16 %v2066
  %v2106 = vunpack.c.l.b16 %v2067
  %v2107 = vunpack.c.l.b16 %v2068
  %v2108 = vunpack.c.l.b16 %v2069
  %v2109 = vunpack.c.l.b16 %v2070
  %v2110 = vunpack.c.l.b16 %v2071
  %v2111 = vunpack.c.l.b16 %v2072
  %v2112 = vunpack.c.l.b16 %v2073
  %v2113 = vunpack.c.l.b16 %v2074
  %v2114 = vunpack.c.l.b16 %v2075
  %v2115 = vunpack.c.l.b16 %v2076
  %v2116 = vunpack.c.l.b16 %v2077
  %v2117 = vunpack.c.l.b16 %v2078
  %v2118 = vunpack.c.l.b16 %v2079
  %v2119 = vunpack.c.l.b16 %v2080
  %v2120 = vpack.c.b16 %v2105, %v2104
  %v2121 = vpack.c.b16 %v2107, %v2106
  %v2122 = vpack.c.b16 %v2109, %v2108
  %v2123 = vpack.c.b16 %v2111, %v2110
  %v2124 = vpack.c.b16 %v2113, %v2112
  %v2125 = vpack.c.b16 %v2115, %v2114
  %v2126 = vpack.c.b16 %v2117, %v2116
  %v2127 = vpack.c.b16 %v2119, %v2118
  %2136 = vmatprep.subr.bf16.mxu0 0
  %2137 = vmatpush1.bf16.msra.mxu0 %v2127
  %2138 = vmatprep.subr.bf16.mxu0 0
  %2139 = vmatpush1.bf16.msra.mxu0 %v2126
  %2140 = vmatprep.subr.bf16.mxu0 0
  %2141 = vmatpush1.bf16.msra.mxu0 %v2125
  %2142 = vmatprep.subr.bf16.mxu0 0
  %2143 = vmatpush1.bf16.msra.mxu0 %v2124
  %2144 = vmatprep.subr.bf16.mxu0 0
  %2145 = vmatpush1.bf16.msra.mxu0 %v2123
  %2146 = vmatprep.subr.bf16.mxu0 0
  %2147 = vmatpush1.bf16.msra.mxu0 %v2122
  %2148 = vmatprep.subr.bf16.mxu0 0
  %2149 = vmatpush1.bf16.msra.mxu0 %v2121
  %2150 = vmatprep.subr.bf16.mxu0 0
  %2151 = vmatpush1.bf16.msra.mxu0 %v2120
  %2152 = vmatprep.subr.bf16.mxu0 0
  %2153 = vmatpush2.bf16.msra.mxu0 0
  %2154 = vmatprep.subr.bf16.mxu0 0
  %2155 = vmatpush2.bf16.msra.mxu0 0
  %2156 = vmatprep.subr.bf16.mxu0 0
  %2157 = vmatpush2.bf16.msra.mxu0 0
  %2158 = vmatprep.subr.bf16.mxu0 0
  %2159 = vmatpush2.bf16.msra.mxu0 0
  %2160 = vmatprep.subr.bf16.mxu0 0
  %2161 = vmatpush2.bf16.msra.mxu0 0
  %2162 = vmatprep.subr.bf16.mxu0 0
  %2163 = vmatpush2.bf16.msra.mxu0 0
  %2164 = vmatprep.subr.bf16.mxu0 0
  %2165 = vmatpush2.bf16.msra.mxu0 0
  %2166 = vmatprep.subr.bf16.mxu0 0
  %2167 = vmatpush2.bf16.msra.mxu0 0
  %2168 = vmatprep.mubr.bf16.mxu0 0
  %2169 = vmatmul.mubr.bf16.gmra.mxu0 %v2064
  %v2170 = vpop.f32.mrf.mxu0
  %v2171 = vadd.f32 %v2086, %v2170
  %v2172 = vpop.f32.mrf.mxu0
  %v2173 = vpop.f32.mrf.mxu0
  %v2174 = vpop.f32.mrf.mxu0
  %2175 = vdwg.mxu0
  %v2176 = vtanh.pop %v2171
  %v2177 = vpack.c.bf16 %v2176, %v2176
  %v2178 = vld [vmem:[%s10] sm:$0xf]
  %v2179 = vld [vmem:[%s10 + $0x4] sm:$0xf]
  %v2180 = vld [vmem:[%s10 + $0x8] sm:$0xf]
  %v2181 = vld [vmem:[%s10 + $0xc] sm:$0xf]
  %v2182 = vld [vmem:[%s10 + $0x10] sm:$0xf]
  %v2183 = vld [vmem:[%s10 + $0x14] sm:$0xf]
  %v2184 = vld [vmem:[%s10 + $0x18] sm:$0xf]
  %v2185 = vld [vmem:[%s10 + $0x1c] sm:$0xf]
  %v2186 = vld [vmem:[%s10 + $0x20] sm:$0xf]
  %v2187 = vld [vmem:[%s10 + $0x24] sm:$0xf]
  %v2188 = vld [vmem:[%s10 + $0x28] sm:$0xf]
  %v2189 = vld [vmem:[%s10 + $0x2c] sm:$0xf]
  %v2190 = vld [vmem:[%s10 + $0x30] sm:$0xf]
  %v2191 = vld [vmem:[%s10 + $0x34] sm:$0xf]
  %v2192 = vld [vmem:[%s10 + $0x38] sm:$0xf]
  %v2193 = vld [vmem:[%s10 + $0x3c] sm:$0xf]
  %v2194 = vld [vmem:[%s11] sm:$0x1]
  %v2196 = vlaneseq
  %v2197 = vshrl.u32 %v2196, 7
  %v2198 = vsub.s32 0, %v2197
  %v2199 = vrot.slane %v2194, %v2198
  %v2217 = vunpack.c.l.b16 %v2178
  %v2218 = vunpack.c.l.b16 %v2179
  %v2219 = vunpack.c.l.b16 %v2180
  %v2220 = vunpack.c.l.b16 %v2181
  %v2221 = vunpack.c.l.b16 %v2182
  %v2222 = vunpack.c.l.b16 %v2183
  %v2223 = vunpack.c.l.b16 %v2184
  %v2224 = vunpack.c.l.b16 %v2185
  %v2225 = vunpack.c.l.b16 %v2186
  %v2226 = vunpack.c.l.b16 %v2187
  %v2227 = vunpack.c.l.b16 %v2188
  %v2228 = vunpack.c.l.b16 %v2189
  %v2229 = vunpack.c.l.b16 %v2190
  %v2230 = vunpack.c.l.b16 %v2191
  %v2231 = vunpack.c.l.b16 %v2192
  %v2232 = vunpack.c.l.b16 %v2193
  %v2233 = vpack.c.b16 %v2218, %v2217
  %v2234 = vpack.c.b16 %v2220, %v2219
  %v2235 = vpack.c.b16 %v2222, %v2221
  %v2236 = vpack.c.b16 %v2224, %v2223
  %v2237 = vpack.c.b16 %v2226, %v2225
  %v2238 = vpack.c.b16 %v2228, %v2227
  %v2239 = vpack.c.b16 %v2230, %v2229
  %v2240 = vpack.c.b16 %v2232, %v2231
  %2249 = vmatprep.subr.bf16.mxu0 0
  %2250 = vmatpush1.bf16.msra.mxu0 %v2240
  %2251 = vmatprep.subr.bf16.mxu0 0
  %2252 = vmatpush1.bf16.msra.mxu0 %v2239
  %2253 = vmatprep.subr.bf16.mxu0 0
  %2254 = vmatpush1.bf16.msra.mxu0 %v2238
  %2255 = vmatprep.subr.bf16.mxu0 0
  %2256 = vmatpush1.bf16.msra.mxu0 %v2237
  %2257 = vmatprep.subr.bf16.mxu0 0
  %2258 = vmatpush1.bf16.msra.mxu0 %v2236
  %2259 = vmatprep.subr.bf16.mxu0 0
  %2260 = vmatpush1.bf16.msra.mxu0 %v2235
  %2261 = vmatprep.subr.bf16.mxu0 0
  %2262 = vmatpush1.bf16.msra.mxu0 %v2234
  %2263 = vmatprep.subr.bf16.mxu0 0
  %2264 = vmatpush1.bf16.msra.mxu0 %v2233
  %2265 = vmatprep.subr.bf16.mxu0 0
  %2266 = vmatpush2.bf16.msra.mxu0 0
  %2267 = vmatprep.subr.bf16.mxu0 0
  %2268 = vmatpush2.bf16.msra.mxu0 0
  %2269 = vmatprep.subr.bf16.mxu0 0
  %2270 = vmatpush2.bf16.msra.mxu0 0
  %2271 = vmatprep.subr.bf16.mxu0 0
  %2272 = vmatpush2.bf16.msra.mxu0 0
  %2273 = vmatprep.subr.bf16.mxu0 0
  %2274 = vmatpush2.bf16.msra.mxu0 0
  %2275 = vmatprep.subr.bf16.mxu0 0
  %2276 = vmatpush2.bf16.msra.mxu0 0
  %2277 = vmatprep.subr.bf16.mxu0 0
  %2278 = vmatpush2.bf16.msra.mxu0 0
  %2279 = vmatprep.subr.bf16.mxu0 0
  %2280 = vmatpush2.bf16.msra.mxu0 0
  %2281 = vmatprep.mubr.bf16.mxu0 0
  %2282 = vmatmul.mubr.bf16.gmra.mxu0 %v2177
  %v2283 = vpop.f32.mrf.mxu0
  %v2284 = vadd.f32 %v2199, %v2283
  %v2285 = vpop.f32.mrf.mxu0
  %v2286 = vpop.f32.mrf.mxu0
  %v2287 = vpop.f32.mrf.mxu0
  %2288 = vdwg.mxu0
  %2289 = vmax.xlane.f32.xlu0 %v2284
  %v2290 = vpop.xlane.xlu0 %2289
  %v2291 = vsub.f32 %v2284, %v2290
  %v2292 = vmul.f32 %v2291, 1.442695
  %v2293 = vpow.pop %v2292
  %2294 = vadd.xlane.f32.xlu0 %v2293
  %v2295 = vpop.xlane.xlu0 %2294
  %v2296 = vrcp.pop %v2295
  %v2297 = vmul.f32 %v2295, %v2296
  %v2298 = vsub.f32 2.0, %v2297
  %v2299 = vmul.f32 %v2296, %v2298
  %v2300 = vmul.f32 %v2293, %v2299
  %2301 = vst [vmem:[%s12] sm:$0xff] %v2300
  // Predicated region
  $region50: #{lenet5_forward.1} parent=0 // pred_check
    _
  $region51: #{lenet5_forward.1} parent=0 // pred_check_branch
    %2303 = sbr.rel (0) target = $region53
  $region52: #{lenet5_forward.1} parent=0 // pred_region
    _
  $region53: #{lenet5_forward.1} parent=0 // pred_fallthru
    _
  // Predicated region
  $region54: #{lenet5_forward.1} parent=0 // pred_check
    _
  $region55: #{lenet5_forward.1} parent=0 // pred_check_branch
    %2305 = sbr.rel (0) target = $region57
  $region56: #{lenet5_forward.1} parent=0 // pred_region
    _
  $region57: #{lenet5_forward.1} parent=0 // pred_fallthru
    _

</llo_original>
